<compile_context>
chip_gen: v7x
topology: tpu7x:2x2x1
jax: 0.10.0
libtpu: 0.0.40
codegen_flags: <defaults>
</compile_context>

<pallas_src>
import jax
import jax.numpy as jnp
from jax import lax
from jax.experimental import pallas as pl
from jax.experimental.pallas import tpu as pltpu

D_MODEL = 32          # scaled-down d_model (PyTorch script uses 512)
N_HEADS = 4
HEAD_DIM = D_MODEL // N_HEADS
LN_EPS = 1e-5


def mha_kernel(q_ref, k_ref, v_ref, w_in_t_ref, b_in_ref, w_out_t_ref, b_out_ref,
               gamma_ref, beta_ref, o_ref):
    """Processes a (b_tile, L, E) block of queries against (b_tile, S, E) keys/values."""
    Bt, L, E = q_ref.shape
    S = k_ref.shape[1]
    Dh = HEAD_DIM

    w_in_t = w_in_t_ref[...]     # (E, 3E) = in_proj_weight.T ; q-columns pre-scaled
    b_in = b_in_ref[...]         # (1, 3E) ; q-part pre-scaled
    w_out_t = w_out_t_ref[...]   # (E, E)  = out_proj.weight.T
    b_out = b_out_ref[...]       # (1, E)
    gamma = gamma_ref[...]       # (1, E)
    beta = beta_ref[...]         # (1, E)

    # Fold batch into the sublane axis so each projection is a single matmul.
    xq = q_ref[...].reshape(Bt * L, E)
    xk = k_ref[...].reshape(Bt * S, E)
    xv = v_ref[...].reshape(Bt * S, E)

    # In-projection: x @ W^T (+ bias); weights already transposed & scale-folded.
    # (At d_model=512 on v6e/v7x, cast the dot inputs to bf16 and keep
    #  preferred_element_type=jnp.float32 accumulation; keep the epilogue f32.)
    qp = jnp.dot(xq, w_in_t[:, 0:E], preferred_element_type=jnp.float32) + b_in[:, 0:E]
    kp = jnp.dot(xk, w_in_t[:, E:2 * E], preferred_element_type=jnp.float32) + b_in[:, E:2 * E]
    vp = jnp.dot(xv, w_in_t[:, 2 * E:3 * E], preferred_element_type=jnp.float32) + b_in[:, 2 * E:3 * E]

    # Static loops over batch and heads; all matmuls are 2D MXU ops.  The
    # out-projection is accumulated per head — no lane-axis concatenate.
    # TODO(synk): at production scale (long S) stream KV flash-style instead of
    # materializing the full (L, S) score block per head.
    for b in range(Bt):
        q_b = qp[b * L:(b + 1) * L, :]        # (L, E)  (row starts are 8-aligned)
        k_b = kp[b * S:(b + 1) * S, :]        # (S, E)
        v_b = vp[b * S:(b + 1) * S, :]        # (S, E)

        acc = jnp.zeros((L, E), jnp.float32)
        for h in range(N_HEADS):
            qh = q_b[:, h * Dh:(h + 1) * Dh]                    # (L, Dh), pre-scaled
            kh = k_b[:, h * Dh:(h + 1) * Dh]                    # (S, Dh)
            vh = v_b[:, h * Dh:(h + 1) * Dh]                    # (S, Dh)
            # scores: contract the head dim of both operands (no materialized k.T)
            s = jnp.einsum("ld,sd->ls", qh, kh,
                           preferred_element_type=jnp.float32)   # (L, S)
            # TODO(synk): key_padding_mask not implemented (forward uses mask=None).
            s = s - jnp.max(s, axis=-1, keepdims=True)
            p = jnp.exp(s)
            p = p * pl.reciprocal(jnp.sum(p, axis=-1, keepdims=True), approx=True)
            oh = jnp.dot(p, vh, preferred_element_type=jnp.float32)   # (L, Dh)
            # fold the out-projection into the head loop (MXU accumulate)
            acc = acc + jnp.dot(oh, w_out_t[h * Dh:(h + 1) * Dh, :],
                                preferred_element_type=jnp.float32)

        # dropout = identity (eval mode); residual + LayerNorm
        y = q_ref[b] + acc + b_out
        mean = jnp.mean(y, axis=-1, keepdims=True)
        var = jnp.mean((y - mean) ** 2, axis=-1, keepdims=True)
        y_norm = (y - mean) * lax.rsqrt(var + LN_EPS)
        o_ref[b] = (y_norm * gamma + beta).astype(o_ref.dtype)


def multi_head_attention(query, key, value, params, *, b_tile=None):
    """query: (B, L, E); key/value: (B, S, E); all float32."""
    B, L, E = query.shape
    S = key.shape[1]
    assert E == D_MODEL

    # Whole batch per grid step at these shapes (kernel is launch-overhead bound).
    # On v7x at production scale pass b_tile=B//2 so the "parallel" grid axis has
    # >=2 steps and both TensorCores get work.
    if b_tile is None:
        b_tile = B
    assert B % b_tile == 0
    grid = (B // b_tile,)

    # One-time wrapper-side weight prep: transpose + fold 1/sqrt(Dh) into Wq, bq.
    scale = 1.0 / (HEAD_DIM ** 0.5)
    col_scale = jnp.concatenate([jnp.full((E,), scale, jnp.float32),
                                 jnp.ones((2 * E,), jnp.float32)])[None, :]
    w_in_t = params["w_in"].T * col_scale          # (E, 3E)
    b_in = params["b_in"] * col_scale              # (1, 3E)
    w_out_t = params["w_out"].T                    # (E, E)

    def batch_spec(seq):
        return pl.BlockSpec((b_tile, seq, E), lambda i: (i, 0, 0))

    def full_spec(shape):
        return pl.BlockSpec(shape, lambda i, n=len(shape): (0,) * n)

    # NOTE: at this toy E=32 the last dim is < 128 lanes (masked stores); at the
    # real d_model=512 the output is naturally lane-dense.  At production scale
    # also raise vmem_limit_bytes via CompilerParams when fattening blocks.
    return pl.pallas_call(
        mha_kernel,
        out_shape=jax.ShapeDtypeStruct((B, L, E), query.dtype),
        grid=grid,
        in_specs=[
            batch_spec(L),                 # query
            batch_spec(S),                 # key
            batch_spec(S),                 # value
            full_spec((E, 3 * E)),         # in_proj_weight^T (q cols pre-scaled)
            full_spec((1, 3 * E)),         # in_proj_bias (q part pre-scaled)
            full_spec((E, E)),             # out_proj.weight^T
            full_spec((1, E)),             # out_proj.bias
            full_spec((1, E)),             # layernorm gamma
            full_spec((1, E)),             # layernorm beta
        ],
        out_specs=pl.BlockSpec((b_tile, L, E), lambda i: (i, 0, 0)),
        compiler_params=pltpu.CompilerParams(dimension_semantics=("parallel",)),
    )(query, key, value, w_in_t, b_in, w_out_t, params["b_out"],
      params["gamma"], params["beta"])


def reference_mha(query, key, value, params):
    """Pure-JAX reference mirroring nn.MultiheadAttention (eval) + residual + LayerNorm."""
    E, H, Dh = D_MODEL, N_HEADS, HEAD_DIM
    w_in, b_in = params["w_in"], params["b_in"][0]
    wq, wk, wv = w_in[:E], w_in[E:2 * E], w_in[2 * E:]
    bq, bk, bv = b_in[:E], b_in[E:2 * E], b_in[2 * E:]

    def split_heads(x):  # (B, T, E) -> (B, H, T, Dh)
        B, T, _ = x.shape
        return x.reshape(B, T, H, Dh).transpose(0, 2, 1, 3)

    q = split_heads(query @ wq.T + bq) / (Dh ** 0.5)
    k = split_heads(key @ wk.T + bk)
    v = split_heads(value @ wv.T + bv)
    s = jnp.einsum("bhld,bhsd->bhls", q, k)
    p = jax.nn.softmax(s, axis=-1)
    o = jnp.einsum("bhls,bhsd->bhld", p, v)           # (B, H, L, Dh)
    B, _, L, _ = o.shape
    o = o.transpose(0, 2, 1, 3).reshape(B, L, E)
    o = o @ params["w_out"].T + params["b_out"][0]
    y = query + o
    mean = y.mean(-1, keepdims=True)
    var = ((y - mean) ** 2).mean(-1, keepdims=True)
    return (y - mean) / jnp.sqrt(var + LN_EPS) * params["gamma"][0] + params["beta"][0]


def init_params(key):
    E = D_MODEL
    k1, k2, k3, k4 = jax.random.split(key, 4)
    return {
        "w_in": 0.05 * jax.random.normal(k1, (3 * E, E), jnp.float32),
        "b_in": 0.01 * jax.random.normal(k2, (1, 3 * E), jnp.float32),
        "w_out": 0.05 * jax.random.normal(k3, (E, E), jnp.float32),
        "b_out": 0.01 * jax.random.normal(k4, (1, E), jnp.float32),
        "gamma": jnp.ones((1, E), jnp.float32),
        "beta": jnp.zeros((1, E), jnp.float32),
    }


if __name__ == "__main__":
    B, L, S, E = 2, 8, 8, D_MODEL
    key = jax.random.PRNGKey(0)
    kq, kk, kv, kp = jax.random.split(key, 4)
    query = jax.random.normal(kq, (B, L, E), jnp.float32)
    k_in = jax.random.normal(kk, (B, S, E), jnp.float32)
    v_in = jax.random.normal(kv, (B, S, E), jnp.float32)
    params = init_params(kp)

    out = multi_head_attention(query, k_in, v_in, params)
    out = jax.block_until_ready(out)

    ref = reference_mha(query, k_in, v_in, params)
    assert out.shape == (B, L, E)
    # tolerance loosened slightly (1e-3) because the softmax denominator uses the
    # EUP approximate reciprocal (pl.reciprocal(..., approx=True)).
    assert jnp.allclose(out, ref, atol=1e-3, rtol=1e-3), "mismatch vs pure-JAX reference"

    print("KERNEL_OK")
</pallas_src>

<mosaic_0001>
module attributes {stable_mosaic.version = 11 : i64} {
  func.func @mha_kernel(%arg0: i32, %arg1: memref<2x8x32xf32, #tpu.memory_space<vmem>>, %arg2: memref<2x8x32xf32, #tpu.memory_space<vmem>>, %arg3: memref<2x8x32xf32, #tpu.memory_space<vmem>>, %arg4: memref<32x96xf32, #tpu.memory_space<vmem>>, %arg5: memref<1x96xf32, #tpu.memory_space<vmem>>, %arg6: memref<32x32xf32, #tpu.memory_space<vmem>>, %arg7: memref<1x32xf32, #tpu.memory_space<vmem>>, %arg8: memref<1x32xf32, #tpu.memory_space<vmem>>, %arg9: memref<1x32xf32, #tpu.memory_space<vmem>>, %arg10: memref<2x8x32xf32, #tpu.memory_space<vmem>>) attributes {dimension_semantics = [#tpu.dimension_semantics<parallel>], iteration_bounds = array<i64: 1>, scalar_prefetch = 0 : i64, scratch_operands = 0 : i64, tpu.core_type = #tpu.core_type<tc>, window_params = [{transform_indices = @transform_0, window_bounds = array<i64: 2, 8, 32>}, {transform_indices = @transform_1, window_bounds = array<i64: 2, 8, 32>}, {transform_indices = @transform_2, window_bounds = array<i64: 2, 8, 32>}, {pipeline_mode = #tpu.pipeline_mode<synchronous>, transform_indices = @transform_3, window_bounds = array<i64: 32, 96>}, {pipeline_mode = #tpu.pipeline_mode<synchronous>, transform_indices = @transform_4, window_bounds = array<i64: 1, 96>}, {pipeline_mode = #tpu.pipeline_mode<synchronous>, transform_indices = @transform_5, window_bounds = array<i64: 32, 32>}, {pipeline_mode = #tpu.pipeline_mode<synchronous>, transform_indices = @transform_6, window_bounds = array<i64: 1, 32>}, {pipeline_mode = #tpu.pipeline_mode<synchronous>, transform_indices = @transform_7, window_bounds = array<i64: 1, 32>}, {pipeline_mode = #tpu.pipeline_mode<synchronous>, transform_indices = @transform_8, window_bounds = array<i64: 1, 32>}, {transform_indices = @transform_9, window_bounds = array<i64: 2, 8, 32>}]} {
    %c0 = arith.constant 0 : index
    %c0_0 = arith.constant 0 : index
    %0 = vector.load %arg4[%c0, %c0_0] : memref<32x96xf32, #tpu.memory_space<vmem>>, vector<32x96xf32>
    %c0_1 = arith.constant 0 : index
    %c0_2 = arith.constant 0 : index
    %1 = vector.load %arg5[%c0_1, %c0_2] : memref<1x96xf32, #tpu.memory_space<vmem>>, vector<1x96xf32>
    %c0_3 = arith.constant 0 : index
    %c0_4 = arith.constant 0 : index
    %2 = vector.load %arg6[%c0_3, %c0_4] : memref<32x32xf32, #tpu.memory_space<vmem>>, vector<32x32xf32>
    %c0_5 = arith.constant 0 : index
    %c0_6 = arith.constant 0 : index
    %3 = vector.load %arg7[%c0_5, %c0_6] : memref<1x32xf32, #tpu.memory_space<vmem>>, vector<1x32xf32>
    %c0_7 = arith.constant 0 : index
    %c0_8 = arith.constant 0 : index
    %4 = vector.load %arg8[%c0_7, %c0_8] : memref<1x32xf32, #tpu.memory_space<vmem>>, vector<1x32xf32>
    %c0_9 = arith.constant 0 : index
    %c0_10 = arith.constant 0 : index
    %5 = vector.load %arg9[%c0_9, %c0_10] : memref<1x32xf32, #tpu.memory_space<vmem>>, vector<1x32xf32>
    %c0_11 = arith.constant 0 : index
    %c0_12 = arith.constant 0 : index
    %c0_13 = arith.constant 0 : index
    %6 = vector.load %arg1[%c0_11, %c0_12, %c0_13] : memref<2x8x32xf32, #tpu.memory_space<vmem>>, vector<2x8x32xf32>
    %7 = vector.shape_cast %6 : vector<2x8x32xf32> to vector<16x32xf32>
    %c0_14 = arith.constant 0 : index
    %c0_15 = arith.constant 0 : index
    %c0_16 = arith.constant 0 : index
    %8 = vector.load %arg2[%c0_14, %c0_15, %c0_16] : memref<2x8x32xf32, #tpu.memory_space<vmem>>, vector<2x8x32xf32>
    %9 = vector.shape_cast %8 : vector<2x8x32xf32> to vector<16x32xf32>
    %c0_17 = arith.constant 0 : index
    %c0_18 = arith.constant 0 : index
    %c0_19 = arith.constant 0 : index
    %10 = vector.load %arg3[%c0_17, %c0_18, %c0_19] : memref<2x8x32xf32, #tpu.memory_space<vmem>>, vector<2x8x32xf32>
    %11 = vector.shape_cast %10 : vector<2x8x32xf32> to vector<16x32xf32>
    %12 = vector.extract_strided_slice %0 {offsets = [0, 0], sizes = [32, 32], strides = [1, 1]} : vector<32x96xf32> to vector<32x32xf32>
    %cst = arith.constant dense<0.000000e+00> : vector<16x32xf32>
    %13 = tpu.matmul %7, %12, %cst {dimension_numbers = #tpu.dot_dimension_numbers<[1], [0], [0], [1], [0, 0, 1, 1], [], []>} : vector<16x32xf32>, vector<32x32xf32>, vector<16x32xf32> -> vector<16x32xf32>
    %14 = vector.extract_strided_slice %1 {offsets = [0, 0], sizes = [1, 32], strides = [1, 1]} : vector<1x96xf32> to vector<1x32xf32>
    %15 = vector.broadcast %14 : vector<1x32xf32> to vector<16x32xf32>
    %16 = arith.addf %13, %15 : vector<16x32xf32>
    %17 = vector.extract_strided_slice %0 {offsets = [0, 32], sizes = [32, 32], strides = [1, 1]} : vector<32x96xf32> to vector<32x32xf32>
    %cst_20 = arith.constant dense<0.000000e+00> : vector<16x32xf32>
    %18 = tpu.matmul %9, %17, %cst_20 {dimension_numbers = #tpu.dot_dimension_numbers<[1], [0], [0], [1], [0, 0, 1, 1], [], []>} : vector<16x32xf32>, vector<32x32xf32>, vector<16x32xf32> -> vector<16x32xf32>
    %19 = vector.extract_strided_slice %1 {offsets = [0, 32], sizes = [1, 32], strides = [1, 1]} : vector<1x96xf32> to vector<1x32xf32>
    %20 = vector.broadcast %19 : vector<1x32xf32> to vector<16x32xf32>
    %21 = arith.addf %18, %20 : vector<16x32xf32>
    %22 = vector.extract_strided_slice %0 {offsets = [0, 64], sizes = [32, 32], strides = [1, 1]} : vector<32x96xf32> to vector<32x32xf32>
    %cst_21 = arith.constant dense<0.000000e+00> : vector<16x32xf32>
    %23 = tpu.matmul %11, %22, %cst_21 {dimension_numbers = #tpu.dot_dimension_numbers<[1], [0], [0], [1], [0, 0, 1, 1], [], []>} : vector<16x32xf32>, vector<32x32xf32>, vector<16x32xf32> -> vector<16x32xf32>
    %24 = vector.extract_strided_slice %1 {offsets = [0, 64], sizes = [1, 32], strides = [1, 1]} : vector<1x96xf32> to vector<1x32xf32>
    %25 = vector.broadcast %24 : vector<1x32xf32> to vector<16x32xf32>
    %26 = arith.addf %23, %25 : vector<16x32xf32>
    %27 = vector.extract_strided_slice %16 {offsets = [0, 0], sizes = [8, 32], strides = [1, 1]} : vector<16x32xf32> to vector<8x32xf32>
    %28 = vector.extract_strided_slice %21 {offsets = [0, 0], sizes = [8, 32], strides = [1, 1]} : vector<16x32xf32> to vector<8x32xf32>
    %29 = vector.extract_strided_slice %26 {offsets = [0, 0], sizes = [8, 32], strides = [1, 1]} : vector<16x32xf32> to vector<8x32xf32>
    %cst_22 = arith.constant 0.000000e+00 : f32
    %30 = vector.broadcast %cst_22 : f32 to vector<8x32xf32>
    %31 = vector.extract_strided_slice %27 {offsets = [0, 0], sizes = [8, 8], strides = [1, 1]} : vector<8x32xf32> to vector<8x8xf32>
    %32 = vector.extract_strided_slice %28 {offsets = [0, 0], sizes = [8, 8], strides = [1, 1]} : vector<8x32xf32> to vector<8x8xf32>
    %33 = vector.extract_strided_slice %29 {offsets = [0, 0], sizes = [8, 8], strides = [1, 1]} : vector<8x32xf32> to vector<8x8xf32>
    "tpu.trace_start"() <{level = 10 : i32, message = "ld,sd->ls"}> : () -> ()
    %cst_23 = arith.constant dense<0.000000e+00> : vector<8x8xf32>
    %34 = tpu.matmul %31, %32, %cst_23 {dimension_numbers = #tpu.dot_dimension_numbers<[1], [1], [0], [0], [0, 0, 1, 0], [], []>} : vector<8x8xf32>, vector<8x8xf32>, vector<8x8xf32> -> vector<8x8xf32>
    "tpu.trace_stop"() : () -> ()
    %cst_24 = arith.constant dense<0xFF800000> : vector<8xf32>
    %35 = vector.multi_reduction <maximumf>, %34, %cst_24 [1] : vector<8x8xf32> to vector<8xf32>
    %36 = vector.shape_cast %35 : vector<8xf32> to vector<8x1xf32>
    %37 = vector.broadcast %36 : vector<8x1xf32> to vector<8x8xf32>
    %38 = arith.subf %34, %37 : vector<8x8xf32>
    %39 = math.exp %38 : vector<8x8xf32>
    %cst_25 = arith.constant dense<0.000000e+00> : vector<8xf32>
    %40 = vector.multi_reduction <add>, %39, %cst_25 [1] : vector<8x8xf32> to vector<8xf32>
    %41 = vector.shape_cast %40 : vector<8xf32> to vector<8x1xf32>
    %42 = tpu.reciprocal %41 {approx = true} : vector<8x1xf32> -> vector<8x1xf32>
    %43 = vector.broadcast %42 : vector<8x1xf32> to vector<8x8xf32>
    %44 = arith.mulf %39, %43 : vector<8x8xf32>
    %cst_26 = arith.constant dense<0.000000e+00> : vector<8x8xf32>
    %45 = tpu.matmul %44, %33, %cst_26 {dimension_numbers = #tpu.dot_dimension_numbers<[1], [0], [0], [1], [0, 0, 1, 1], [], []>} : vector<8x8xf32>, vector<8x8xf32>, vector<8x8xf32> -> vector<8x8xf32>
    %46 = vector.extract_strided_slice %2 {offsets = [0, 0], sizes = [8, 32], strides = [1, 1]} : vector<32x32xf32> to vector<8x32xf32>
    %cst_27 = arith.constant dense<0.000000e+00> : vector<8x32xf32>
    %47 = tpu.matmul %45, %46, %cst_27 {dimension_numbers = #tpu.dot_dimension_numbers<[1], [0], [0], [1], [0, 0, 1, 1], [], []>} : vector<8x8xf32>, vector<8x32xf32>, vector<8x32xf32> -> vector<8x32xf32>
    %48 = arith.addf %30, %47 : vector<8x32xf32>
    %49 = vector.extract_strided_slice %27 {offsets = [0, 8], sizes = [8, 8], strides = [1, 1]} : vector<8x32xf32> to vector<8x8xf32>
    %50 = vector.extract_strided_slice %28 {offsets = [0, 8], sizes = [8, 8], strides = [1, 1]} : vector<8x32xf32> to vector<8x8xf32>
    %51 = vector.extract_strided_slice %29 {offsets = [0, 8], sizes = [8, 8], strides = [1, 1]} : vector<8x32xf32> to vector<8x8xf32>
    "tpu.trace_start"() <{level = 10 : i32, message = "ld,sd->ls"}> : () -> ()
    %cst_28 = arith.constant dense<0.000000e+00> : vector<8x8xf32>
    %52 = tpu.matmul %49, %50, %cst_28 {dimension_numbers = #tpu.dot_dimension_numbers<[1], [1], [0], [0], [0, 0, 1, 0], [], []>} : vector<8x8xf32>, vector<8x8xf32>, vector<8x8xf32> -> vector<8x8xf32>
    "tpu.trace_stop"() : () -> ()
    %cst_29 = arith.constant dense<0xFF800000> : vector<8xf32>
    %53 = vector.multi_reduction <maximumf>, %52, %cst_29 [1] : vector<8x8xf32> to vector<8xf32>
    %54 = vector.shape_cast %53 : vector<8xf32> to vector<8x1xf32>
    %55 = vector.broadcast %54 : vector<8x1xf32> to vector<8x8xf32>
    %56 = arith.subf %52, %55 : vector<8x8xf32>
    %57 = math.exp %56 : vector<8x8xf32>
    %cst_30 = arith.constant dense<0.000000e+00> : vector<8xf32>
    %58 = vector.multi_reduction <add>, %57, %cst_30 [1] : vector<8x8xf32> to vector<8xf32>
    %59 = vector.shape_cast %58 : vector<8xf32> to vector<8x1xf32>
    %60 = tpu.reciprocal %59 {approx = true} : vector<8x1xf32> -> vector<8x1xf32>
    %61 = vector.broadcast %60 : vector<8x1xf32> to vector<8x8xf32>
    %62 = arith.mulf %57, %61 : vector<8x8xf32>
    %cst_31 = arith.constant dense<0.000000e+00> : vector<8x8xf32>
    %63 = tpu.matmul %62, %51, %cst_31 {dimension_numbers = #tpu.dot_dimension_numbers<[1], [0], [0], [1], [0, 0, 1, 1], [], []>} : vector<8x8xf32>, vector<8x8xf32>, vector<8x8xf32> -> vector<8x8xf32>
    %64 = vector.extract_strided_slice %2 {offsets = [8, 0], sizes = [8, 32], strides = [1, 1]} : vector<32x32xf32> to vector<8x32xf32>
    %cst_32 = arith.constant dense<0.000000e+00> : vector<8x32xf32>
    %65 = tpu.matmul %63, %64, %cst_32 {dimension_numbers = #tpu.dot_dimension_numbers<[1], [0], [0], [1], [0, 0, 1, 1], [], []>} : vector<8x8xf32>, vector<8x32xf32>, vector<8x32xf32> -> vector<8x32xf32>
    %66 = arith.addf %48, %65 : vector<8x32xf32>
    %67 = vector.extract_strided_slice %27 {offsets = [0, 16], sizes = [8, 8], strides = [1, 1]} : vector<8x32xf32> to vector<8x8xf32>
    %68 = vector.extract_strided_slice %28 {offsets = [0, 16], sizes = [8, 8], strides = [1, 1]} : vector<8x32xf32> to vector<8x8xf32>
    %69 = vector.extract_strided_slice %29 {offsets = [0, 16], sizes = [8, 8], strides = [1, 1]} : vector<8x32xf32> to vector<8x8xf32>
    "tpu.trace_start"() <{level = 10 : i32, message = "ld,sd->ls"}> : () -> ()
    %cst_33 = arith.constant dense<0.000000e+00> : vector<8x8xf32>
    %70 = tpu.matmul %67, %68, %cst_33 {dimension_numbers = #tpu.dot_dimension_numbers<[1], [1], [0], [0], [0, 0, 1, 0], [], []>} : vector<8x8xf32>, vector<8x8xf32>, vector<8x8xf32> -> vector<8x8xf32>
    "tpu.trace_stop"() : () -> ()
    %cst_34 = arith.constant dense<0xFF800000> : vector<8xf32>
    %71 = vector.multi_reduction <maximumf>, %70, %cst_34 [1] : vector<8x8xf32> to vector<8xf32>
    %72 = vector.shape_cast %71 : vector<8xf32> to vector<8x1xf32>
    %73 = vector.broadcast %72 : vector<8x1xf32> to vector<8x8xf32>
    %74 = arith.subf %70, %73 : vector<8x8xf32>
    %75 = math.exp %74 : vector<8x8xf32>
    %cst_35 = arith.constant dense<0.000000e+00> : vector<8xf32>
    %76 = vector.multi_reduction <add>, %75, %cst_35 [1] : vector<8x8xf32> to vector<8xf32>
    %77 = vector.shape_cast %76 : vector<8xf32> to vector<8x1xf32>
    %78 = tpu.reciprocal %77 {approx = true} : vector<8x1xf32> -> vector<8x1xf32>
    %79 = vector.broadcast %78 : vector<8x1xf32> to vector<8x8xf32>
    %80 = arith.mulf %75, %79 : vector<8x8xf32>
    %cst_36 = arith.constant dense<0.000000e+00> : vector<8x8xf32>
    %81 = tpu.matmul %80, %69, %cst_36 {dimension_numbers = #tpu.dot_dimension_numbers<[1], [0], [0], [1], [0, 0, 1, 1], [], []>} : vector<8x8xf32>, vector<8x8xf32>, vector<8x8xf32> -> vector<8x8xf32>
    %82 = vector.extract_strided_slice %2 {offsets = [16, 0], sizes = [8, 32], strides = [1, 1]} : vector<32x32xf32> to vector<8x32xf32>
    %cst_37 = arith.constant dense<0.000000e+00> : vector<8x32xf32>
    %83 = tpu.matmul %81, %82, %cst_37 {dimension_numbers = #tpu.dot_dimension_numbers<[1], [0], [0], [1], [0, 0, 1, 1], [], []>} : vector<8x8xf32>, vector<8x32xf32>, vector<8x32xf32> -> vector<8x32xf32>
    %84 = arith.addf %66, %83 : vector<8x32xf32>
    %85 = vector.extract_strided_slice %27 {offsets = [0, 24], sizes = [8, 8], strides = [1, 1]} : vector<8x32xf32> to vector<8x8xf32>
    %86 = vector.extract_strided_slice %28 {offsets = [0, 24], sizes = [8, 8], strides = [1, 1]} : vector<8x32xf32> to vector<8x8xf32>
    %87 = vector.extract_strided_slice %29 {offsets = [0, 24], sizes = [8, 8], strides = [1, 1]} : vector<8x32xf32> to vector<8x8xf32>
    "tpu.trace_start"() <{level = 10 : i32, message = "ld,sd->ls"}> : () -> ()
    %cst_38 = arith.constant dense<0.000000e+00> : vector<8x8xf32>
    %88 = tpu.matmul %85, %86, %cst_38 {dimension_numbers = #tpu.dot_dimension_numbers<[1], [1], [0], [0], [0, 0, 1, 0], [], []>} : vector<8x8xf32>, vector<8x8xf32>, vector<8x8xf32> -> vector<8x8xf32>
    "tpu.trace_stop"() : () -> ()
    %cst_39 = arith.constant dense<0xFF800000> : vector<8xf32>
    %89 = vector.multi_reduction <maximumf>, %88, %cst_39 [1] : vector<8x8xf32> to vector<8xf32>
    %90 = vector.shape_cast %89 : vector<8xf32> to vector<8x1xf32>
    %91 = vector.broadcast %90 : vector<8x1xf32> to vector<8x8xf32>
    %92 = arith.subf %88, %91 : vector<8x8xf32>
    %93 = math.exp %92 : vector<8x8xf32>
    %cst_40 = arith.constant dense<0.000000e+00> : vector<8xf32>
    %94 = vector.multi_reduction <add>, %93, %cst_40 [1] : vector<8x8xf32> to vector<8xf32>
    %95 = vector.shape_cast %94 : vector<8xf32> to vector<8x1xf32>
    %96 = tpu.reciprocal %95 {approx = true} : vector<8x1xf32> -> vector<8x1xf32>
    %97 = vector.broadcast %96 : vector<8x1xf32> to vector<8x8xf32>
    %98 = arith.mulf %93, %97 : vector<8x8xf32>
    %cst_41 = arith.constant dense<0.000000e+00> : vector<8x8xf32>
    %99 = tpu.matmul %98, %87, %cst_41 {dimension_numbers = #tpu.dot_dimension_numbers<[1], [0], [0], [1], [0, 0, 1, 1], [], []>} : vector<8x8xf32>, vector<8x8xf32>, vector<8x8xf32> -> vector<8x8xf32>
    %100 = vector.extract_strided_slice %2 {offsets = [24, 0], sizes = [8, 32], strides = [1, 1]} : vector<32x32xf32> to vector<8x32xf32>
    %cst_42 = arith.constant dense<0.000000e+00> : vector<8x32xf32>
    %101 = tpu.matmul %99, %100, %cst_42 {dimension_numbers = #tpu.dot_dimension_numbers<[1], [0], [0], [1], [0, 0, 1, 1], [], []>} : vector<8x8xf32>, vector<8x32xf32>, vector<8x32xf32> -> vector<8x32xf32>
    %102 = arith.addf %84, %101 : vector<8x32xf32>
    %c0_43 = arith.constant 0 : index
    %c0_44 = arith.constant 0 : index
    %c0_45 = arith.constant 0 : index
    %103 = vector.load %arg1[%c0_43, %c0_44, %c0_45] : memref<2x8x32xf32, #tpu.memory_space<vmem>>, vector<1x8x32xf32>
    %104 = vector.shape_cast %103 : vector<1x8x32xf32> to vector<8x32xf32>
    %105 = arith.addf %104, %102 : vector<8x32xf32>
    %106 = vector.broadcast %3 : vector<1x32xf32> to vector<8x32xf32>
    %107 = arith.addf %105, %106 : vector<8x32xf32>
    %cst_46 = arith.constant dense<0.000000e+00> : vector<8xf32>
    %108 = vector.multi_reduction <add>, %107, %cst_46 [1] : vector<8x32xf32> to vector<8xf32>
    %109 = vector.shape_cast %108 : vector<8xf32> to vector<8x1xf32>
    %cst_47 = arith.constant 3.200000e+01 : f32
    %110 = vector.broadcast %cst_47 : f32 to vector<8x1xf32>
    %111 = arith.divf %109, %110 : vector<8x1xf32>
    %112 = vector.broadcast %111 : vector<8x1xf32> to vector<8x32xf32>
    %113 = arith.subf %107, %112 : vector<8x32xf32>
    %114 = arith.mulf %113, %113 : vector<8x32xf32>
    %cst_48 = arith.constant dense<0.000000e+00> : vector<8xf32>
    %115 = vector.multi_reduction <add>, %114, %cst_48 [1] : vector<8x32xf32> to vector<8xf32>
    %116 = vector.shape_cast %115 : vector<8xf32> to vector<8x1xf32>
    %cst_49 = arith.constant 3.200000e+01 : f32
    %117 = vector.broadcast %cst_49 : f32 to vector<8x1xf32>
    %118 = arith.divf %116, %117 : vector<8x1xf32>
    %119 = vector.broadcast %111 : vector<8x1xf32> to vector<8x32xf32>
    %120 = arith.subf %107, %119 : vector<8x32xf32>
    %cst_50 = arith.constant 9.99999974E-6 : f32
    %121 = vector.broadcast %cst_50 : f32 to vector<8x1xf32>
    %122 = arith.addf %118, %121 : vector<8x1xf32>
    %123 = math.rsqrt %122 : vector<8x1xf32>
    %124 = vector.broadcast %123 : vector<8x1xf32> to vector<8x32xf32>
    %125 = arith.mulf %120, %124 : vector<8x32xf32>
    %126 = vector.broadcast %4 : vector<1x32xf32> to vector<8x32xf32>
    %127 = arith.mulf %125, %126 : vector<8x32xf32>
    %128 = vector.broadcast %5 : vector<1x32xf32> to vector<8x32xf32>
    %129 = arith.addf %127, %128 : vector<8x32xf32>
    %c0_51 = arith.constant 0 : index
    %c0_52 = arith.constant 0 : index
    %c0_53 = arith.constant 0 : index
    %130 = vector.load %arg10[%c0_51, %c0_52, %c0_53] : memref<2x8x32xf32, #tpu.memory_space<vmem>>, vector<1x8x32xf32>
    %131 = vector.shape_cast %130 : vector<1x8x32xf32> to vector<8x32xf32>
    %132 = vector.shape_cast %129 : vector<8x32xf32> to vector<1x8x32xf32>
    tpu.vector_store %arg10[%c0_51, %c0_52, %c0_53], %132 {strides = array<i32>} : memref<2x8x32xf32, #tpu.memory_space<vmem>>, vector<1x8x32xf32>,
    %133 = vector.extract_strided_slice %16 {offsets = [8, 0], sizes = [8, 32], strides = [1, 1]} : vector<16x32xf32> to vector<8x32xf32>
    %134 = vector.extract_strided_slice %21 {offsets = [8, 0], sizes = [8, 32], strides = [1, 1]} : vector<16x32xf32> to vector<8x32xf32>
    %135 = vector.extract_strided_slice %26 {offsets = [8, 0], sizes = [8, 32], strides = [1, 1]} : vector<16x32xf32> to vector<8x32xf32>
    %cst_54 = arith.constant 0.000000e+00 : f32
    %136 = vector.broadcast %cst_54 : f32 to vector<8x32xf32>
    %137 = vector.extract_strided_slice %133 {offsets = [0, 0], sizes = [8, 8], strides = [1, 1]} : vector<8x32xf32> to vector<8x8xf32>
    %138 = vector.extract_strided_slice %134 {offsets = [0, 0], sizes = [8, 8], strides = [1, 1]} : vector<8x32xf32> to vector<8x8xf32>
    %139 = vector.extract_strided_slice %135 {offsets = [0, 0], sizes = [8, 8], strides = [1, 1]} : vector<8x32xf32> to vector<8x8xf32>
    "tpu.trace_start"() <{level = 10 : i32, message = "ld,sd->ls"}> : () -> ()
    %cst_55 = arith.constant dense<0.000000e+00> : vector<8x8xf32>
    %140 = tpu.matmul %137, %138, %cst_55 {dimension_numbers = #tpu.dot_dimension_numbers<[1], [1], [0], [0], [0, 0, 1, 0], [], []>} : vector<8x8xf32>, vector<8x8xf32>, vector<8x8xf32> -> vector<8x8xf32>
    "tpu.trace_stop"() : () -> ()
    %cst_56 = arith.constant dense<0xFF800000> : vector<8xf32>
    %141 = vector.multi_reduction <maximumf>, %140, %cst_56 [1] : vector<8x8xf32> to vector<8xf32>
    %142 = vector.shape_cast %141 : vector<8xf32> to vector<8x1xf32>
    %143 = vector.broadcast %142 : vector<8x1xf32> to vector<8x8xf32>
    %144 = arith.subf %140, %143 : vector<8x8xf32>
    %145 = math.exp %144 : vector<8x8xf32>
    %cst_57 = arith.constant dense<0.000000e+00> : vector<8xf32>
    %146 = vector.multi_reduction <add>, %145, %cst_57 [1] : vector<8x8xf32> to vector<8xf32>
    %147 = vector.shape_cast %146 : vector<8xf32> to vector<8x1xf32>
    %148 = tpu.reciprocal %147 {approx = true} : vector<8x1xf32> -> vector<8x1xf32>
    %149 = vector.broadcast %148 : vector<8x1xf32> to vector<8x8xf32>
    %150 = arith.mulf %145, %149 : vector<8x8xf32>
    %cst_58 = arith.constant dense<0.000000e+00> : vector<8x8xf32>
    %151 = tpu.matmul %150, %139, %cst_58 {dimension_numbers = #tpu.dot_dimension_numbers<[1], [0], [0], [1], [0, 0, 1, 1], [], []>} : vector<8x8xf32>, vector<8x8xf32>, vector<8x8xf32> -> vector<8x8xf32>
    %152 = vector.extract_strided_slice %2 {offsets = [0, 0], sizes = [8, 32], strides = [1, 1]} : vector<32x32xf32> to vector<8x32xf32>
    %cst_59 = arith.constant dense<0.000000e+00> : vector<8x32xf32>
    %153 = tpu.matmul %151, %152, %cst_59 {dimension_numbers = #tpu.dot_dimension_numbers<[1], [0], [0], [1], [0, 0, 1, 1], [], []>} : vector<8x8xf32>, vector<8x32xf32>, vector<8x32xf32> -> vector<8x32xf32>
    %154 = arith.addf %136, %153 : vector<8x32xf32>
    %155 = vector.extract_strided_slice %133 {offsets = [0, 8], sizes = [8, 8], strides = [1, 1]} : vector<8x32xf32> to vector<8x8xf32>
    %156 = vector.extract_strided_slice %134 {offsets = [0, 8], sizes = [8, 8], strides = [1, 1]} : vector<8x32xf32> to vector<8x8xf32>
    %157 = vector.extract_strided_slice %135 {offsets = [0, 8], sizes = [8, 8], strides = [1, 1]} : vector<8x32xf32> to vector<8x8xf32>
    "tpu.trace_start"() <{level = 10 : i32, message = "ld,sd->ls"}> : () -> ()
    %cst_60 = arith.constant dense<0.000000e+00> : vector<8x8xf32>
    %158 = tpu.matmul %155, %156, %cst_60 {dimension_numbers = #tpu.dot_dimension_numbers<[1], [1], [0], [0], [0, 0, 1, 0], [], []>} : vector<8x8xf32>, vector<8x8xf32>, vector<8x8xf32> -> vector<8x8xf32>
    "tpu.trace_stop"() : () -> ()
    %cst_61 = arith.constant dense<0xFF800000> : vector<8xf32>
    %159 = vector.multi_reduction <maximumf>, %158, %cst_61 [1] : vector<8x8xf32> to vector<8xf32>
    %160 = vector.shape_cast %159 : vector<8xf32> to vector<8x1xf32>
    %161 = vector.broadcast %160 : vector<8x1xf32> to vector<8x8xf32>
    %162 = arith.subf %158, %161 : vector<8x8xf32>
    %163 = math.exp %162 : vector<8x8xf32>
    %cst_62 = arith.constant dense<0.000000e+00> : vector<8xf32>
    %164 = vector.multi_reduction <add>, %163, %cst_62 [1] : vector<8x8xf32> to vector<8xf32>
    %165 = vector.shape_cast %164 : vector<8xf32> to vector<8x1xf32>
    %166 = tpu.reciprocal %165 {approx = true} : vector<8x1xf32> -> vector<8x1xf32>
    %167 = vector.broadcast %166 : vector<8x1xf32> to vector<8x8xf32>
    %168 = arith.mulf %163, %167 : vector<8x8xf32>
    %cst_63 = arith.constant dense<0.000000e+00> : vector<8x8xf32>
    %169 = tpu.matmul %168, %157, %cst_63 {dimension_numbers = #tpu.dot_dimension_numbers<[1], [0], [0], [1], [0, 0, 1, 1], [], []>} : vector<8x8xf32>, vector<8x8xf32>, vector<8x8xf32> -> vector<8x8xf32>
    %170 = vector.extract_strided_slice %2 {offsets = [8, 0], sizes = [8, 32], strides = [1, 1]} : vector<32x32xf32> to vector<8x32xf32>
    %cst_64 = arith.constant dense<0.000000e+00> : vector<8x32xf32>
    %171 = tpu.matmul %169, %170, %cst_64 {dimension_numbers = #tpu.dot_dimension_numbers<[1], [0], [0], [1], [0, 0, 1, 1], [], []>} : vector<8x8xf32>, vector<8x32xf32>, vector<8x32xf32> -> vector<8x32xf32>
    %172 = arith.addf %154, %171 : vector<8x32xf32>
    %173 = vector.extract_strided_slice %133 {offsets = [0, 16], sizes = [8, 8], strides = [1, 1]} : vector<8x32xf32> to vector<8x8xf32>
    %174 = vector.extract_strided_slice %134 {offsets = [0, 16], sizes = [8, 8], strides = [1, 1]} : vector<8x32xf32> to vector<8x8xf32>
    %175 = vector.extract_strided_slice %135 {offsets = [0, 16], sizes = [8, 8], strides = [1, 1]} : vector<8x32xf32> to vector<8x8xf32>
    "tpu.trace_start"() <{level = 10 : i32, message = "ld,sd->ls"}> : () -> ()
    %cst_65 = arith.constant dense<0.000000e+00> : vector<8x8xf32>
    %176 = tpu.matmul %173, %174, %cst_65 {dimension_numbers = #tpu.dot_dimension_numbers<[1], [1], [0], [0], [0, 0, 1, 0], [], []>} : vector<8x8xf32>, vector<8x8xf32>, vector<8x8xf32> -> vector<8x8xf32>
    "tpu.trace_stop"() : () -> ()
    %cst_66 = arith.constant dense<0xFF800000> : vector<8xf32>
    %177 = vector.multi_reduction <maximumf>, %176, %cst_66 [1] : vector<8x8xf32> to vector<8xf32>
    %178 = vector.shape_cast %177 : vector<8xf32> to vector<8x1xf32>
    %179 = vector.broadcast %178 : vector<8x1xf32> to vector<8x8xf32>
    %180 = arith.subf %176, %179 : vector<8x8xf32>
    %181 = math.exp %180 : vector<8x8xf32>
    %cst_67 = arith.constant dense<0.000000e+00> : vector<8xf32>
    %182 = vector.multi_reduction <add>, %181, %cst_67 [1] : vector<8x8xf32> to vector<8xf32>
    %183 = vector.shape_cast %182 : vector<8xf32> to vector<8x1xf32>
    %184 = tpu.reciprocal %183 {approx = true} : vector<8x1xf32> -> vector<8x1xf32>
    %185 = vector.broadcast %184 : vector<8x1xf32> to vector<8x8xf32>
    %186 = arith.mulf %181, %185 : vector<8x8xf32>
    %cst_68 = arith.constant dense<0.000000e+00> : vector<8x8xf32>
    %187 = tpu.matmul %186, %175, %cst_68 {dimension_numbers = #tpu.dot_dimension_numbers<[1], [0], [0], [1], [0, 0, 1, 1], [], []>} : vector<8x8xf32>, vector<8x8xf32>, vector<8x8xf32> -> vector<8x8xf32>
    %188 = vector.extract_strided_slice %2 {offsets = [16, 0], sizes = [8, 32], strides = [1, 1]} : vector<32x32xf32> to vector<8x32xf32>
    %cst_69 = arith.constant dense<0.000000e+00> : vector<8x32xf32>
    %189 = tpu.matmul %187, %188, %cst_69 {dimension_numbers = #tpu.dot_dimension_numbers<[1], [0], [0], [1], [0, 0, 1, 1], [], []>} : vector<8x8xf32>, vector<8x32xf32>, vector<8x32xf32> -> vector<8x32xf32>
    %190 = arith.addf %172, %189 : vector<8x32xf32>
    %191 = vector.extract_strided_slice %133 {offsets = [0, 24], sizes = [8, 8], strides = [1, 1]} : vector<8x32xf32> to vector<8x8xf32>
    %192 = vector.extract_strided_slice %134 {offsets = [0, 24], sizes = [8, 8], strides = [1, 1]} : vector<8x32xf32> to vector<8x8xf32>
    %193 = vector.extract_strided_slice %135 {offsets = [0, 24], sizes = [8, 8], strides = [1, 1]} : vector<8x32xf32> to vector<8x8xf32>
    "tpu.trace_start"() <{level = 10 : i32, message = "ld,sd->ls"}> : () -> ()
    %cst_70 = arith.constant dense<0.000000e+00> : vector<8x8xf32>
    %194 = tpu.matmul %191, %192, %cst_70 {dimension_numbers = #tpu.dot_dimension_numbers<[1], [1], [0], [0], [0, 0, 1, 0], [], []>} : vector<8x8xf32>, vector<8x8xf32>, vector<8x8xf32> -> vector<8x8xf32>
    "tpu.trace_stop"() : () -> ()
    %cst_71 = arith.constant dense<0xFF800000> : vector<8xf32>
    %195 = vector.multi_reduction <maximumf>, %194, %cst_71 [1] : vector<8x8xf32> to vector<8xf32>
    %196 = vector.shape_cast %195 : vector<8xf32> to vector<8x1xf32>
    %197 = vector.broadcast %196 : vector<8x1xf32> to vector<8x8xf32>
    %198 = arith.subf %194, %197 : vector<8x8xf32>
    %199 = math.exp %198 : vector<8x8xf32>
    %cst_72 = arith.constant dense<0.000000e+00> : vector<8xf32>
    %200 = vector.multi_reduction <add>, %199, %cst_72 [1] : vector<8x8xf32> to vector<8xf32>
    %201 = vector.shape_cast %200 : vector<8xf32> to vector<8x1xf32>
    %202 = tpu.reciprocal %201 {approx = true} : vector<8x1xf32> -> vector<8x1xf32>
    %203 = vector.broadcast %202 : vector<8x1xf32> to vector<8x8xf32>
    %204 = arith.mulf %199, %203 : vector<8x8xf32>
    %cst_73 = arith.constant dense<0.000000e+00> : vector<8x8xf32>
    %205 = tpu.matmul %204, %193, %cst_73 {dimension_numbers = #tpu.dot_dimension_numbers<[1], [0], [0], [1], [0, 0, 1, 1], [], []>} : vector<8x8xf32>, vector<8x8xf32>, vector<8x8xf32> -> vector<8x8xf32>
    %206 = vector.extract_strided_slice %2 {offsets = [24, 0], sizes = [8, 32], strides = [1, 1]} : vector<32x32xf32> to vector<8x32xf32>
    %cst_74 = arith.constant dense<0.000000e+00> : vector<8x32xf32>
    %207 = tpu.matmul %205, %206, %cst_74 {dimension_numbers = #tpu.dot_dimension_numbers<[1], [0], [0], [1], [0, 0, 1, 1], [], []>} : vector<8x8xf32>, vector<8x32xf32>, vector<8x32xf32> -> vector<8x32xf32>
    %208 = arith.addf %190, %207 : vector<8x32xf32>
    %c1 = arith.constant 1 : index
    %c0_75 = arith.constant 0 : index
    %c0_76 = arith.constant 0 : index
    %209 = vector.load %arg1[%c1, %c0_75, %c0_76] : memref<2x8x32xf32, #tpu.memory_space<vmem>>, vector<1x8x32xf32>
    %210 = vector.shape_cast %209 : vector<1x8x32xf32> to vector<8x32xf32>
    %211 = arith.addf %210, %208 : vector<8x32xf32>
    %212 = vector.broadcast %3 : vector<1x32xf32> to vector<8x32xf32>
    %213 = arith.addf %211, %212 : vector<8x32xf32>
    %cst_77 = arith.constant dense<0.000000e+00> : vector<8xf32>
    %214 = vector.multi_reduction <add>, %213, %cst_77 [1] : vector<8x32xf32> to vector<8xf32>
    %215 = vector.shape_cast %214 : vector<8xf32> to vector<8x1xf32>
    %cst_78 = arith.constant 3.200000e+01 : f32
    %216 = vector.broadcast %cst_78 : f32 to vector<8x1xf32>
    %217 = arith.divf %215, %216 : vector<8x1xf32>
    %218 = vector.broadcast %217 : vector<8x1xf32> to vector<8x32xf32>
    %219 = arith.subf %213, %218 : vector<8x32xf32>
    %220 = arith.mulf %219, %219 : vector<8x32xf32>
    %cst_79 = arith.constant dense<0.000000e+00> : vector<8xf32>
    %221 = vector.multi_reduction <add>, %220, %cst_79 [1] : vector<8x32xf32> to vector<8xf32>
    %222 = vector.shape_cast %221 : vector<8xf32> to vector<8x1xf32>
    %cst_80 = arith.constant 3.200000e+01 : f32
    %223 = vector.broadcast %cst_80 : f32 to vector<8x1xf32>
    %224 = arith.divf %222, %223 : vector<8x1xf32>
    %225 = vector.broadcast %217 : vector<8x1xf32> to vector<8x32xf32>
    %226 = arith.subf %213, %225 : vector<8x32xf32>
    %cst_81 = arith.constant 9.99999974E-6 : f32
    %227 = vector.broadcast %cst_81 : f32 to vector<8x1xf32>
    %228 = arith.addf %224, %227 : vector<8x1xf32>
    %229 = math.rsqrt %228 : vector<8x1xf32>
    %230 = vector.broadcast %229 : vector<8x1xf32> to vector<8x32xf32>
    %231 = arith.mulf %226, %230 : vector<8x32xf32>
    %232 = vector.broadcast %4 : vector<1x32xf32> to vector<8x32xf32>
    %233 = arith.mulf %231, %232 : vector<8x32xf32>
    %234 = vector.broadcast %5 : vector<1x32xf32> to vector<8x32xf32>
    %235 = arith.addf %233, %234 : vector<8x32xf32>
    %c1_82 = arith.constant 1 : index
    %c0_83 = arith.constant 0 : index
    %c0_84 = arith.constant 0 : index
    %236 = vector.load %arg10[%c1_82, %c0_83, %c0_84] : memref<2x8x32xf32, #tpu.memory_space<vmem>>, vector<1x8x32xf32>
    %237 = vector.shape_cast %236 : vector<1x8x32xf32> to vector<8x32xf32>
    %238 = vector.shape_cast %235 : vector<8x32xf32> to vector<1x8x32xf32>
    tpu.vector_store %arg10[%c1_82, %c0_83, %c0_84], %238 {strides = array<i32>} : memref<2x8x32xf32, #tpu.memory_space<vmem>>, vector<1x8x32xf32>,
    return
  }
  func.func @transform_0(%arg0: i32) -> (i32, i32, i32) {
    %c0_i32 = arith.constant 0 : i32
    %c0_i32_0 = arith.constant 0 : i32
    %c0_i32_1 = arith.constant 0 : i32
    return %arg0, %c0_i32, %c0_i32_0 : i32, i32, i32
  }
  func.func @transform_1(%arg0: i32) -> (i32, i32, i32) {
    %c0_i32 = arith.constant 0 : i32
    %c0_i32_0 = arith.constant 0 : i32
    %c0_i32_1 = arith.constant 0 : i32
    return %arg0, %c0_i32, %c0_i32_0 : i32, i32, i32
  }
  func.func @transform_2(%arg0: i32) -> (i32, i32, i32) {
    %c0_i32 = arith.constant 0 : i32
    %c0_i32_0 = arith.constant 0 : i32
    %c0_i32_1 = arith.constant 0 : i32
    return %arg0, %c0_i32, %c0_i32_0 : i32, i32, i32
  }
  func.func @transform_3(%arg0: i32) -> (i32, i32) {
    %c0_i32 = arith.constant 0 : i32
    %c0_i32_0 = arith.constant 0 : i32
    %c0_i32_1 = arith.constant 0 : i32
    return %c0_i32, %c0_i32_0 : i32, i32
  }
  func.func @transform_4(%arg0: i32) -> (i32, i32) {
    %c0_i32 = arith.constant 0 : i32
    %c0_i32_0 = arith.constant 0 : i32
    %c0_i32_1 = arith.constant 0 : i32
    return %c0_i32, %c0_i32_0 : i32, i32
  }
  func.func @transform_5(%arg0: i32) -> (i32, i32) {
    %c0_i32 = arith.constant 0 : i32
    %c0_i32_0 = arith.constant 0 : i32
    %c0_i32_1 = arith.constant 0 : i32
    return %c0_i32, %c0_i32_0 : i32, i32
  }
  func.func @transform_6(%arg0: i32) -> (i32, i32) {
    %c0_i32 = arith.constant 0 : i32
    %c0_i32_0 = arith.constant 0 : i32
    %c0_i32_1 = arith.constant 0 : i32
    return %c0_i32, %c0_i32_0 : i32, i32
  }
  func.func @transform_7(%arg0: i32) -> (i32, i32) {
    %c0_i32 = arith.constant 0 : i32
    %c0_i32_0 = arith.constant 0 : i32
    %c0_i32_1 = arith.constant 0 : i32
    return %c0_i32, %c0_i32_0 : i32, i32
  }
  func.func @transform_8(%arg0: i32) -> (i32, i32) {
    %c0_i32 = arith.constant 0 : i32
    %c0_i32_0 = arith.constant 0 : i32
    %c0_i32_1 = arith.constant 0 : i32
    return %c0_i32, %c0_i32_0 : i32, i32
  }
  func.func @transform_9(%arg0: i32) -> (i32, i32, i32) {
    %c0_i32 = arith.constant 0 : i32
    %c0_i32_0 = arith.constant 0 : i32
    %c0_i32_1 = arith.constant 0 : i32
    return %arg0, %c0_i32, %c0_i32_0 : i32, i32, i32
  }
}

</mosaic_0001>

<llo_original>
// kernel: tpu_custom_call.1
$region0: #{tpu_custom_call.1}
  #allocation0 [shape = 'u32[]', space=smem, size = 0x4, offset = 0x4, fixed_abs, tag = 'smem constant byte address 0x4 - core index']
  #allocation1 [shape = 'u32[144,128]{1,0:T(1,128)}', space=vmem, size = 0x12000, scoped, tag = 'internal scratch']
  %s0 = inlined_call_operand.hbm [shape: f32[2,8,32], index: 0, kind: input, shape index: {}]
  %s1 = inlined_call_operand.hbm [shape: f32[2,8,32], index: 1, kind: input, shape index: {}]
  %s2 = inlined_call_operand.hbm [shape: f32[2,8,32], index: 2, kind: input, shape index: {}]
  %s3 = inlined_call_operand.hbm [shape: f32[32,96], index: 3, kind: input, shape index: {}]
  %s4 = inlined_call_operand.vmem [shape: f32[1,96], index: 4, kind: input, shape index: {}]
  %s5 = inlined_call_operand.hbm [shape: f32[32,32], index: 5, kind: input, shape index: {}]
  %s6 = inlined_call_operand.vmem [shape: f32[1,32], index: 6, kind: input, shape index: {}]
  %s7 = inlined_call_operand.vmem [shape: f32[1,32], index: 7, kind: input, shape index: {}]
  %s8 = inlined_call_operand.vmem [shape: f32[1,32], index: 8, kind: input, shape index: {}]
  %s9 = inlined_call_operand.hbm [shape: f32[2,8,32], index: 9, kind: output, shape index: {}]
  %s10 = sld [smem:[#allocation0]]
  $region66: #{tpu_custom_call.1} parent=0
    _
  %s12 = ssub.s32 1, %s10
  %s13 = scalar_select 0, %s12, %s10
  $region1: #{tpu_custom_call.1} parent=0
    #allocation2 [shape = 'u8[8192]{0}', space=vmem, size = 0x2000, scoped, tag = 'input window, operand 0, single buffered']
    #allocation3 [shape = 's32[1]{0}', space=sflag, size = 0x4, scoped, tag = 'scoped memory for tpu_custom_call.1']
    #allocation4 [shape = 's32[1]{0}', space=sflag, size = 0x4, scoped, tag = 'scoped memory for tpu_custom_call.1']
    #allocation5 [shape = 'u8[8192]{0}', space=vmem, size = 0x2000, scoped, tag = 'input window, operand 1, single buffered']
    #allocation6 [shape = 's32[1]{0}', space=sflag, size = 0x4, scoped, tag = 'scoped memory for tpu_custom_call.1']
    #allocation7 [shape = 'u8[8192]{0}', space=vmem, size = 0x2000, scoped, tag = 'input window, operand 2, single buffered']
    #allocation8 [shape = 'u8[16384]{0}', space=vmem, size = 0x4000, scoped, tag = 'input window, operand 3, single buffered']
    #allocation9 [shape = 's32[1]{0}', space=sflag, size = 0x4, scoped, tag = 'scoped memory for tpu_custom_call.1']
    #allocation10 [shape = 'u8[16384]{0}', space=vmem, size = 0x4000, scoped, tag = 'input window, operand 5, single buffered']
    #allocation11 [shape = 'u8[8192]{0}', space=vmem, size = 0x2000, scoped, tag = 'output window, operand 0, single buffered']
    %14 = vsyncpa [#allocation3], 0
    %15 = vsyncpa [#allocation6], 0
    %16 = vsyncpa [#allocation9], 0
    %17 = vsyncpa [#allocation4], 0
    // Predicated region
    $region2: #{tpu_custom_call.1} parent=1 // pred_check
      _
    $region3: #{tpu_custom_call.1} parent=1 // pred_check_branch
      %19 = sbr.rel (0) target = $region5
    $region4: #{tpu_custom_call.1} parent=1 // pred_region
      %s21 = ssub.s32 256, 256
      %22 = vsyncadd [#allocation3], %s21
      %s23 = sshll.u32 [#allocation2], 4
      %s24 = int_to_ptr.vmem [resolvable:$true] %s23
      %29 = dma.hbm_to_vmem [thread:$0]  %s0, 256, %s24, [#allocation3], 128, 128, 8
    $region5: #{tpu_custom_call.1} parent=1 // pred_fallthru
      _
    // Predicated region
    $region6: #{tpu_custom_call.1} parent=1 // pred_check
      _
    $region7: #{tpu_custom_call.1} parent=1 // pred_check_branch
      %31 = sbr.rel (0) target = $region9
    $region8: #{tpu_custom_call.1} parent=1 // pred_region
      %s33 = ssub.s32 256, 256
      %34 = vsyncadd [#allocation6], %s33
      %s35 = sshll.u32 [#allocation5], 4
      %s36 = int_to_ptr.vmem [resolvable:$true] %s35
      %41 = dma.hbm_to_vmem [thread:$0]  %s1, 256, %s36, [#allocation6], 128, 128, 8
    $region9: #{tpu_custom_call.1} parent=1 // pred_fallthru
      _
    // Predicated region
    $region10: #{tpu_custom_call.1} parent=1 // pred_check
      _
    $region11: #{tpu_custom_call.1} parent=1 // pred_check_branch
      %43 = sbr.rel (0) target = $region13
    $region12: #{tpu_custom_call.1} parent=1 // pred_region
      %s45 = ssub.s32 256, 256
      %46 = vsyncadd [#allocation6], %s45
      %s47 = sshll.u32 [#allocation7], 4
      %s48 = int_to_ptr.vmem [resolvable:$true] %s47
      %53 = dma.hbm_to_vmem [thread:$0]  %s2, 256, %s48, [#allocation6], 128, 128, 8
    $region13: #{tpu_custom_call.1} parent=1 // pred_fallthru
      _
    // Predicated region
    $region14: #{tpu_custom_call.1} parent=1 // pred_check
      _
    $region15: #{tpu_custom_call.1} parent=1 // pred_check_branch
      %55 = sbr.rel (0) target = $region17
    $region16: #{tpu_custom_call.1} parent=1 // pred_region
      %s57 = ssub.s32 512, 512
      %58 = vsyncadd [#allocation9], %s57
      %s59 = sshll.u32 [#allocation8], 4
      %s60 = int_to_ptr.vmem [resolvable:$true] %s59
      %65 = dma.hbm_to_vmem [thread:$0]  %s3, 512, %s60, [#allocation9], 128, 128, 8
    $region17: #{tpu_custom_call.1} parent=1 // pred_fallthru
      _
    // Predicated region
    $region18: #{tpu_custom_call.1} parent=1 // pred_check
      _
    $region19: #{tpu_custom_call.1} parent=1 // pred_check_branch
      %67 = sbr.rel (0) target = $region21
    $region20: #{tpu_custom_call.1} parent=1 // pred_region
      _
    $region21: #{tpu_custom_call.1} parent=1 // pred_fallthru
      _
    // Predicated region
    $region22: #{tpu_custom_call.1} parent=1 // pred_check
      _
    $region23: #{tpu_custom_call.1} parent=1 // pred_check_branch
      %69 = sbr.rel (0) target = $region25
    $region24: #{tpu_custom_call.1} parent=1 // pred_region
      %s71 = ssub.s32 512, 512
      %72 = vsyncadd [#allocation9], %s71
      %s73 = sshll.u32 [#allocation10], 4
      %s74 = int_to_ptr.vmem [resolvable:$true] %s73
      %79 = dma.hbm_to_vmem [thread:$0]  %s5, 512, %s74, [#allocation9], 128, 128, 8
    $region25: #{tpu_custom_call.1} parent=1 // pred_fallthru
      _
    // Predicated region
    $region26: #{tpu_custom_call.1} parent=1 // pred_check
      _
    $region27: #{tpu_custom_call.1} parent=1 // pred_check_branch
      %81 = sbr.rel (0) target = $region29
    $region28: #{tpu_custom_call.1} parent=1 // pred_region
      _
    $region29: #{tpu_custom_call.1} parent=1 // pred_fallthru
      _
    // Predicated region
    $region30: #{tpu_custom_call.1} parent=1 // pred_check
      _
    $region31: #{tpu_custom_call.1} parent=1 // pred_check_branch
      %83 = sbr.rel (0) target = $region33
    $region32: #{tpu_custom_call.1} parent=1 // pred_region
      _
    $region33: #{tpu_custom_call.1} parent=1 // pred_fallthru
      _
    // Predicated region
    $region34: #{tpu_custom_call.1} parent=1 // pred_check
      _
    $region35: #{tpu_custom_call.1} parent=1 // pred_check_branch
      %85 = sbr.rel (0) target = $region37
    $region36: #{tpu_custom_call.1} parent=1 // pred_region
      _
    $region37: #{tpu_custom_call.1} parent=1 // pred_fallthru
      _
    // Predicated region
    $region38: #{tpu_custom_call.1} parent=1 // pred_check
      _
    $region39: #{tpu_custom_call.1} parent=1 // pred_check_branch
      %87 = sbr.rel (0) target = $region41
    $region40: #{tpu_custom_call.1} parent=1 // pred_region
      %88 = dma.done [#allocation3], 256
    $region41: #{tpu_custom_call.1} parent=1 // pred_fallthru
      _
    // Predicated region
    $region42: #{tpu_custom_call.1} parent=1 // pred_check
      _
    $region43: #{tpu_custom_call.1} parent=1 // pred_check_branch
      %90 = sbr.rel (0) target = $region45
    $region44: #{tpu_custom_call.1} parent=1 // pred_region
      %91 = dma.done [#allocation6], 256
    $region45: #{tpu_custom_call.1} parent=1 // pred_fallthru
      _
    // Predicated region
    $region46: #{tpu_custom_call.1} parent=1 // pred_check
      _
    $region47: #{tpu_custom_call.1} parent=1 // pred_check_branch
      %93 = sbr.rel (0) target = $region49
    $region48: #{tpu_custom_call.1} parent=1 // pred_region
      %94 = dma.done [#allocation6], 256
    $region49: #{tpu_custom_call.1} parent=1 // pred_fallthru
      _
    // Predicated region
    $region50: #{tpu_custom_call.1} parent=1 // pred_check
      _
    $region51: #{tpu_custom_call.1} parent=1 // pred_check_branch
      %96 = sbr.rel (0) target = $region53
    $region52: #{tpu_custom_call.1} parent=1 // pred_region
      %97 = dma.done [#allocation9], 512
    $region53: #{tpu_custom_call.1} parent=1 // pred_fallthru
      _
    // Predicated region
    $region54: #{tpu_custom_call.1} parent=1 // pred_check
      _
    $region55: #{tpu_custom_call.1} parent=1 // pred_check_branch
      %99 = sbr.rel (0) target = $region57
    $region56: #{tpu_custom_call.1} parent=1 // pred_region
      %100 = dma.done [#allocation9], 512
    $region57: #{tpu_custom_call.1} parent=1 // pred_fallthru
      _
    %v101 = vld [vmem:[#allocation8] sm:$0xff]
    %v102 = vld [vmem:[#allocation8 + $0x8] sm:$0xff]
    %v103 = vld [vmem:[#allocation8 + $0x10] sm:$0xff]
    %v104 = vld [vmem:[#allocation8 + $0x18] sm:$0xff]
    %v105 = vld [vmem:[%s4] sm:$0x1]
    %v106 = vld [vmem:[#allocation10] sm:$0xff]
    %v107 = vld [vmem:[#allocation10 + $0x8] sm:$0xff]
    %v108 = vld [vmem:[#allocation10 + $0x10] sm:$0xff]
    %v109 = vld [vmem:[#allocation10 + $0x18] sm:$0xff]
    %v110 = vld [vmem:[%s6] sm:$0x1]
    %v111 = vld [vmem:[%s7] sm:$0x1]
    %v112 = vld [vmem:[%s8] sm:$0x1]
    %v113 = vld [vmem:[#allocation2] sm:$0xff]
    %v114 = vld [vmem:[#allocation2 + $0x8] sm:$0xff]
    %v115 = vld [vmem:[#allocation5] sm:$0xff]
    %v116 = vld [vmem:[#allocation5 + $0x8] sm:$0xff]
    %v117 = vld [vmem:[#allocation7] sm:$0xff]
    %v118 = vld [vmem:[#allocation7 + $0x8] sm:$0xff]
    %v120 = vlaneseq
    %v121 = vshrl.u32 %v120, 7
    %v122 = vsub.s32 0, %v121
    %v123 = vrot.slane %v105, %v122
    %vm125 = vcmask 261120
    %v127 = vsel %vm125, %v113, 0
    %v130 = vsel %vm125, %v114, 0
    %132 = vmatprep.subr.mxu0 0.0
    %133 = vmatpush1.msra.mxu0 %v101
    %134 = vmatprep.subr.mxu0 0.0
    %135 = vmatpush1.msra.mxu0 %v102
    %136 = vmatprep.subr.mxu0 0.0
    %137 = vmatpush1.msra.mxu0 %v103
    %138 = vmatprep.subr.mxu0 0.0
    %139 = vmatpush1.msra.mxu0 %v104
    %140 = vmatprep.subr.mxu0 0.0
    %141 = vmatpush1.msra.mxu0 0.0
    %142 = vmatprep.subr.mxu0 0.0
    %143 = vmatpush1.msra.mxu0 0.0
    %144 = vmatprep.subr.mxu0 0.0
    %145 = vmatpush1.msra.mxu0 0.0
    %146 = vmatprep.subr.mxu0 0.0
    %147 = vmatpush1.msra.mxu0 0.0
    %148 = vmatprep.subr.mxu0 0.0
    %149 = vmatpush1.msra.mxu0 0.0
    %150 = vmatprep.subr.mxu0 0.0
    %151 = vmatpush1.msra.mxu0 0.0
    %152 = vmatprep.subr.mxu0 0.0
    %153 = vmatpush1.msra.mxu0 0.0
    %154 = vmatprep.subr.mxu0 0.0
    %155 = vmatpush1.msra.mxu0 0.0
    %156 = vmatprep.subr.mxu0 0.0
    %157 = vmatpush1.msra.mxu0 0.0
    %158 = vmatprep.subr.mxu0 0.0
    %159 = vmatpush1.msra.mxu0 0.0
    %160 = vmatprep.subr.mxu0 0.0
    %161 = vmatpush1.msra.mxu0 0.0
    %162 = vmatprep.subr.mxu0 0.0
    %163 = vmatpush1.msra.mxu0 0.0
    %164 = vmatprep.subr.mxu0 0.0
    %165 = vmatpush1.msra.mxu0 0.0
    %166 = vmatprep.subr.mxu0 0.0
    %167 = vmatpush1.msra.mxu0 0.0
    %168 = vmatprep.subr.mxu0 0.0
    %169 = vmatpush1.msra.mxu0 0.0
    %170 = vmatprep.subr.mxu0 0.0
    %171 = vmatpush1.msra.mxu0 0.0
    %172 = vmatprep.subr.mxu0 0.0
    %173 = vmatpush1.msra.mxu0 0.0
    %174 = vmatprep.subr.mxu0 0.0
    %175 = vmatpush1.msra.mxu0 0.0
    %176 = vmatprep.subr.mxu0 0.0
    %177 = vmatpush1.msra.mxu0 0.0
    %178 = vmatprep.subr.mxu0 0.0
    %179 = vmatpush1.msra.mxu0 0.0
    %180 = vmatprep.subr.mxu0 0.0
    %181 = vmatpush1.msra.mxu0 0.0
    %182 = vmatprep.subr.mxu0 0.0
    %183 = vmatpush1.msra.mxu0 0.0
    %184 = vmatprep.subr.mxu0 0.0
    %185 = vmatpush1.msra.mxu0 0.0
    %186 = vmatprep.subr.mxu0 0.0
    %187 = vmatpush1.msra.mxu0 0.0
    %188 = vmatprep.subr.mxu0 0.0
    %189 = vmatpush1.msra.mxu0 0.0
    %190 = vmatprep.subr.mxu0 0.0
    %191 = vmatpush1.msra.mxu0 0.0
    %192 = vmatprep.subr.mxu0 0.0
    %193 = vmatpush1.msra.mxu0 0.0
    %194 = vmatprep.subr.mxu0 0.0
    %195 = vmatpush1.msra.mxu0 0.0
    %196 = vmatprep.mubr.f32.mxu0 0.0
    %197 = vmatmul.mubr.f32.gmra.mrb[0].mxu0 %v127
    %v198 = vpop.f32.mrb[0].mxu0
    %v199 = vadd.f32 %v123, %v198
    %v200 = vpop.f32.mrb[0].mxu0
    %201 = vmatprep.mubr.f32.mxu0 0.0
    %202 = vmatmul.mubr.f32.gmra.mrb[0].mxu0 %v130
    %v203 = vpop.f32.mrb[0].mxu0
    %v204 = vadd.f32 %v123, %v203
    %v205 = vpop.f32.mrb[0].mxu0
    %206 = vdwg.mxu0
    %211 = vrot.lane.b32.xlu0 %v101, 96
    %v212 = vpop.permute.xlu0 %211
    %213 = vrot.lane.b32.xlu0 %v102, 96
    %v214 = vpop.permute.xlu0 %213
    %215 = vrot.lane.b32.xlu0 %v103, 96
    %v216 = vpop.permute.xlu0 %215
    %217 = vrot.lane.b32.xlu0 %v104, 96
    %v218 = vpop.permute.xlu0 %217
    %223 = vrot.lane.b32.xlu0 %v123, 96
    %v224 = vpop.permute.xlu0 %223
    %v227 = vsel %vm125, %v115, 0
    %v230 = vsel %vm125, %v116, 0
    %232 = vmatprep.subr.mxu0 0.0
    %233 = vmatpush1.msra.mxu0 %v212
    %234 = vmatprep.subr.mxu0 0.0
    %235 = vmatpush1.msra.mxu0 %v214
    %236 = vmatprep.subr.mxu0 0.0
    %237 = vmatpush1.msra.mxu0 %v216
    %238 = vmatprep.subr.mxu0 0.0
    %239 = vmatpush1.msra.mxu0 %v218
    %240 = vmatprep.subr.mxu0 0.0
    %241 = vmatpush1.msra.mxu0 0.0
    %242 = vmatprep.subr.mxu0 0.0
    %243 = vmatpush1.msra.mxu0 0.0
    %244 = vmatprep.subr.mxu0 0.0
    %245 = vmatpush1.msra.mxu0 0.0
    %246 = vmatprep.subr.mxu0 0.0
    %247 = vmatpush1.msra.mxu0 0.0
    %248 = vmatprep.subr.mxu0 0.0
    %249 = vmatpush1.msra.mxu0 0.0
    %250 = vmatprep.subr.mxu0 0.0
    %251 = vmatpush1.msra.mxu0 0.0
    %252 = vmatprep.subr.mxu0 0.0
    %253 = vmatpush1.msra.mxu0 0.0
    %254 = vmatprep.subr.mxu0 0.0
    %255 = vmatpush1.msra.mxu0 0.0
    %256 = vmatprep.subr.mxu0 0.0
    %257 = vmatpush1.msra.mxu0 0.0
    %258 = vmatprep.subr.mxu0 0.0
    %259 = vmatpush1.msra.mxu0 0.0
    %260 = vmatprep.subr.mxu0 0.0
    %261 = vmatpush1.msra.mxu0 0.0
    %262 = vmatprep.subr.mxu0 0.0
    %263 = vmatpush1.msra.mxu0 0.0
    %264 = vmatprep.subr.mxu0 0.0
    %265 = vmatpush1.msra.mxu0 0.0
    %266 = vmatprep.subr.mxu0 0.0
    %267 = vmatpush1.msra.mxu0 0.0
    %268 = vmatprep.subr.mxu0 0.0
    %269 = vmatpush1.msra.mxu0 0.0
    %270 = vmatprep.subr.mxu0 0.0
    %271 = vmatpush1.msra.mxu0 0.0
    %272 = vmatprep.subr.mxu0 0.0
    %273 = vmatpush1.msra.mxu0 0.0
    %274 = vmatprep.subr.mxu0 0.0
    %275 = vmatpush1.msra.mxu0 0.0
    %276 = vmatprep.subr.mxu0 0.0
    %277 = vmatpush1.msra.mxu0 0.0
    %278 = vmatprep.subr.mxu0 0.0
    %279 = vmatpush1.msra.mxu0 0.0
    %280 = vmatprep.subr.mxu0 0.0
    %281 = vmatpush1.msra.mxu0 0.0
    %282 = vmatprep.subr.mxu0 0.0
    %283 = vmatpush1.msra.mxu0 0.0
    %284 = vmatprep.subr.mxu0 0.0
    %285 = vmatpush1.msra.mxu0 0.0
    %286 = vmatprep.subr.mxu0 0.0
    %287 = vmatpush1.msra.mxu0 0.0
    %288 = vmatprep.subr.mxu0 0.0
    %289 = vmatpush1.msra.mxu0 0.0
    %290 = vmatprep.subr.mxu0 0.0
    %291 = vmatpush1.msra.mxu0 0.0
    %292 = vmatprep.subr.mxu0 0.0
    %293 = vmatpush1.msra.mxu0 0.0
    %294 = vmatprep.subr.mxu0 0.0
    %295 = vmatpush1.msra.mxu0 0.0
    %296 = vmatprep.mubr.f32.mxu0 0.0
    %297 = vmatmul.mubr.f32.gmra.mrb[0].mxu0 %v227
    %v298 = vpop.f32.mrb[0].mxu0
    %v299 = vadd.f32 %v224, %v298
    %v300 = vpop.f32.mrb[0].mxu0
    %301 = vmatprep.mubr.f32.mxu0 0.0
    %302 = vmatmul.mubr.f32.gmra.mrb[0].mxu0 %v230
    %v303 = vpop.f32.mrb[0].mxu0
    %v304 = vadd.f32 %v224, %v303
    %v305 = vpop.f32.mrb[0].mxu0
    %306 = vdwg.mxu0
    %307 = vrot.lane.b32.xlu0 %v101, 64
    %v308 = vpop.permute.xlu0 %307
    %309 = vrot.lane.b32.xlu0 %v102, 64
    %v310 = vpop.permute.xlu0 %309
    %311 = vrot.lane.b32.xlu0 %v103, 64
    %v312 = vpop.permute.xlu0 %311
    %313 = vrot.lane.b32.xlu0 %v104, 64
    %v314 = vpop.permute.xlu0 %313
    %319 = vrot.lane.b32.xlu0 %v123, 64
    %v320 = vpop.permute.xlu0 %319
    %v323 = vsel %vm125, %v117, 0
    %v326 = vsel %vm125, %v118, 0
    %328 = vmatprep.subr.mxu0 0.0
    %329 = vmatpush1.msra.mxu0 %v308
    %330 = vmatprep.subr.mxu0 0.0
    %331 = vmatpush1.msra.mxu0 %v310
    %332 = vmatprep.subr.mxu0 0.0
    %333 = vmatpush1.msra.mxu0 %v312
    %334 = vmatprep.subr.mxu0 0.0
    %335 = vmatpush1.msra.mxu0 %v314
    %336 = vmatprep.subr.mxu0 0.0
    %337 = vmatpush1.msra.mxu0 0.0
    %338 = vmatprep.subr.mxu0 0.0
    %339 = vmatpush1.msra.mxu0 0.0
    %340 = vmatprep.subr.mxu0 0.0
    %341 = vmatpush1.msra.mxu0 0.0
    %342 = vmatprep.subr.mxu0 0.0
    %343 = vmatpush1.msra.mxu0 0.0
    %344 = vmatprep.subr.mxu0 0.0
    %345 = vmatpush1.msra.mxu0 0.0
    %346 = vmatprep.subr.mxu0 0.0
    %347 = vmatpush1.msra.mxu0 0.0
    %348 = vmatprep.subr.mxu0 0.0
    %349 = vmatpush1.msra.mxu0 0.0
    %350 = vmatprep.subr.mxu0 0.0
    %351 = vmatpush1.msra.mxu0 0.0
    %352 = vmatprep.subr.mxu0 0.0
    %353 = vmatpush1.msra.mxu0 0.0
    %354 = vmatprep.subr.mxu0 0.0
    %355 = vmatpush1.msra.mxu0 0.0
    %356 = vmatprep.subr.mxu0 0.0
    %357 = vmatpush1.msra.mxu0 0.0
    %358 = vmatprep.subr.mxu0 0.0
    %359 = vmatpush1.msra.mxu0 0.0
    %360 = vmatprep.subr.mxu0 0.0
    %361 = vmatpush1.msra.mxu0 0.0
    %362 = vmatprep.subr.mxu0 0.0
    %363 = vmatpush1.msra.mxu0 0.0
    %364 = vmatprep.subr.mxu0 0.0
    %365 = vmatpush1.msra.mxu0 0.0
    %366 = vmatprep.subr.mxu0 0.0
    %367 = vmatpush1.msra.mxu0 0.0
    %368 = vmatprep.subr.mxu0 0.0
    %369 = vmatpush1.msra.mxu0 0.0
    %370 = vmatprep.subr.mxu0 0.0
    %371 = vmatpush1.msra.mxu0 0.0
    %372 = vmatprep.subr.mxu0 0.0
    %373 = vmatpush1.msra.mxu0 0.0
    %374 = vmatprep.subr.mxu0 0.0
    %375 = vmatpush1.msra.mxu0 0.0
    %376 = vmatprep.subr.mxu0 0.0
    %377 = vmatpush1.msra.mxu0 0.0
    %378 = vmatprep.subr.mxu0 0.0
    %379 = vmatpush1.msra.mxu0 0.0
    %380 = vmatprep.subr.mxu0 0.0
    %381 = vmatpush1.msra.mxu0 0.0
    %382 = vmatprep.subr.mxu0 0.0
    %383 = vmatpush1.msra.mxu0 0.0
    %384 = vmatprep.subr.mxu0 0.0
    %385 = vmatpush1.msra.mxu0 0.0
    %386 = vmatprep.subr.mxu0 0.0
    %387 = vmatpush1.msra.mxu0 0.0
    %388 = vmatprep.subr.mxu0 0.0
    %389 = vmatpush1.msra.mxu0 0.0
    %390 = vmatprep.subr.mxu0 0.0
    %391 = vmatpush1.msra.mxu0 0.0
    %392 = vmatprep.mubr.f32.mxu0 0.0
    %393 = vmatmul.mubr.f32.gmra.mrb[0].mxu0 %v323
    %v394 = vpop.f32.mrb[0].mxu0
    %v395 = vadd.f32 %v320, %v394
    %v396 = vpop.f32.mrb[0].mxu0
    %397 = vmatprep.mubr.f32.mxu0 0.0
    %398 = vmatmul.mubr.f32.gmra.mrb[0].mxu0 %v326
    %v399 = vpop.f32.mrb[0].mxu0
    %v400 = vadd.f32 %v320, %v399
    %v401 = vpop.f32.mrb[0].mxu0
    %402 = vdwg.mxu0
    %vm403 = vcmask 64512
    %v405 = vsel %vm403, %v199, 0
    %v408 = vsel %vm403, %v299, 0
    %410 = vmatprep.subr.mxu0 0.0
    %411 = vmatpush1.xpose.msra.mxu0 %v408
    %412 = vmatprep.subr.mxu0 0.0
    %413 = vmatpush1.xpose.msra.mxu0 0.0
    %414 = vmatprep.subr.mxu0 0.0
    %415 = vmatpush1.xpose.msra.mxu0 0.0
    %416 = vmatprep.subr.mxu0 0.0
    %417 = vmatpush1.xpose.msra.mxu0 0.0
    %418 = vmatprep.subr.mxu0 0.0
    %419 = vmatpush1.xpose.msra.mxu0 0.0
    %420 = vmatprep.subr.mxu0 0.0
    %421 = vmatpush1.xpose.msra.mxu0 0.0
    %422 = vmatprep.subr.mxu0 0.0
    %423 = vmatpush1.xpose.msra.mxu0 0.0
    %424 = vmatprep.subr.mxu0 0.0
    %425 = vmatpush1.xpose.msra.mxu0 0.0
    %426 = vmatprep.subr.mxu0 0.0
    %427 = vmatpush1.xpose.msra.mxu0 0.0
    %428 = vmatprep.subr.mxu0 0.0
    %429 = vmatpush1.xpose.msra.mxu0 0.0
    %430 = vmatprep.subr.mxu0 0.0
    %431 = vmatpush1.xpose.msra.mxu0 0.0
    %432 = vmatprep.subr.mxu0 0.0
    %433 = vmatpush1.xpose.msra.mxu0 0.0
    %434 = vmatprep.subr.mxu0 0.0
    %435 = vmatpush1.xpose.msra.mxu0 0.0
    %436 = vmatprep.subr.mxu0 0.0
    %437 = vmatpush1.xpose.msra.mxu0 0.0
    %438 = vmatprep.subr.mxu0 0.0
    %439 = vmatpush1.xpose.msra.mxu0 0.0
    %440 = vmatprep.subr.mxu0 0.0
    %441 = vmatpush1.xpose.msra.mxu0 0.0
    %442 = vmatprep.subr.mxu0 0.0
    %443 = vmatpush1.xpose.msra.mxu0 0.0
    %444 = vmatprep.subr.mxu0 0.0
    %445 = vmatpush1.xpose.msra.mxu0 0.0
    %446 = vmatprep.subr.mxu0 0.0
    %447 = vmatpush1.xpose.msra.mxu0 0.0
    %448 = vmatprep.subr.mxu0 0.0
    %449 = vmatpush1.xpose.msra.mxu0 0.0
    %450 = vmatprep.subr.mxu0 0.0
    %451 = vmatpush1.xpose.msra.mxu0 0.0
    %452 = vmatprep.subr.mxu0 0.0
    %453 = vmatpush1.xpose.msra.mxu0 0.0
    %454 = vmatprep.subr.mxu0 0.0
    %455 = vmatpush1.xpose.msra.mxu0 0.0
    %456 = vmatprep.subr.mxu0 0.0
    %457 = vmatpush1.xpose.msra.mxu0 0.0
    %458 = vmatprep.subr.mxu0 0.0
    %459 = vmatpush1.xpose.msra.mxu0 0.0
    %460 = vmatprep.subr.mxu0 0.0
    %461 = vmatpush1.xpose.msra.mxu0 0.0
    %462 = vmatprep.subr.mxu0 0.0
    %463 = vmatpush1.xpose.msra.mxu0 0.0
    %464 = vmatprep.subr.mxu0 0.0
    %465 = vmatpush1.xpose.msra.mxu0 0.0
    %466 = vmatprep.subr.mxu0 0.0
    %467 = vmatpush1.xpose.msra.mxu0 0.0
    %468 = vmatprep.subr.mxu0 0.0
    %469 = vmatpush1.xpose.msra.mxu0 0.0
    %470 = vmatprep.subr.mxu0 0.0
    %471 = vmatpush1.xpose.msra.mxu0 0.0
    %472 = vmatprep.subr.mxu0 0.0
    %473 = vmatpush1.xpose.msra.mxu0 0.0
    %474 = vmatprep.mubr.f32.mxu0 0.0
    %475 = vmatmul.mubr.f32.gmra.mrb[0].mxu0 %v405
    %v476 = vpop.f32.mrb[0].mxu0
    %v477 = vadd.f32 0.0, %v476
    %v478 = vpop.f32.mrb[0].mxu0
    %479 = vdwg.mxu0
    %v480 = vsel %vm403, %v477, -inf
    %481 = vmax.xlane.f32.xlu0 %v480
    %v482 = vpop.xlane.xlu0 %481
    %v483 = vsub.f32 %v477, %v482
    %v484 = vmul.f32 %v483, 1.442695
    %v485 = vpow.pop %v484
    %v486 = vsel %vm403, %v485, 0.0
    %487 = vadd.xlane.f32.xlu0 %v486
    %v488 = vpop.xlane.xlu0 %487
    %v489 = vrcp.pop %v488
    %v490 = vmul.f32 %v485, %v489
    %v492 = vsel %vm403, %v490, 0
    %494 = vmatprep.subr.mxu0 0.0
    %495 = vmatpush1.msra.mxu0 %v395
    %496 = vmatprep.subr.mxu0 0.0
    %497 = vmatpush1.msra.mxu0 0.0
    %498 = vmatprep.subr.mxu0 0.0
    %499 = vmatpush1.msra.mxu0 0.0
    %500 = vmatprep.subr.mxu0 0.0
    %501 = vmatpush1.msra.mxu0 0.0
    %502 = vmatprep.subr.mxu0 0.0
    %503 = vmatpush1.msra.mxu0 0.0
    %504 = vmatprep.subr.mxu0 0.0
    %505 = vmatpush1.msra.mxu0 0.0
    %506 = vmatprep.subr.mxu0 0.0
    %507 = vmatpush1.msra.mxu0 0.0
    %508 = vmatprep.subr.mxu0 0.0
    %509 = vmatpush1.msra.mxu0 0.0
    %510 = vmatprep.subr.mxu0 0.0
    %511 = vmatpush1.msra.mxu0 0.0
    %512 = vmatprep.subr.mxu0 0.0
    %513 = vmatpush1.msra.mxu0 0.0
    %514 = vmatprep.subr.mxu0 0.0
    %515 = vmatpush1.msra.mxu0 0.0
    %516 = vmatprep.subr.mxu0 0.0
    %517 = vmatpush1.msra.mxu0 0.0
    %518 = vmatprep.subr.mxu0 0.0
    %519 = vmatpush1.msra.mxu0 0.0
    %520 = vmatprep.subr.mxu0 0.0
    %521 = vmatpush1.msra.mxu0 0.0
    %522 = vmatprep.subr.mxu0 0.0
    %523 = vmatpush1.msra.mxu0 0.0
    %524 = vmatprep.subr.mxu0 0.0
    %525 = vmatpush1.msra.mxu0 0.0
    %526 = vmatprep.subr.mxu0 0.0
    %527 = vmatpush1.msra.mxu0 0.0
    %528 = vmatprep.subr.mxu0 0.0
    %529 = vmatpush1.msra.mxu0 0.0
    %530 = vmatprep.subr.mxu0 0.0
    %531 = vmatpush1.msra.mxu0 0.0
    %532 = vmatprep.subr.mxu0 0.0
    %533 = vmatpush1.msra.mxu0 0.0
    %534 = vmatprep.subr.mxu0 0.0
    %535 = vmatpush1.msra.mxu0 0.0
    %536 = vmatprep.subr.mxu0 0.0
    %537 = vmatpush1.msra.mxu0 0.0
    %538 = vmatprep.subr.mxu0 0.0
    %539 = vmatpush1.msra.mxu0 0.0
    %540 = vmatprep.subr.mxu0 0.0
    %541 = vmatpush1.msra.mxu0 0.0
    %542 = vmatprep.subr.mxu0 0.0
    %543 = vmatpush1.msra.mxu0 0.0
    %544 = vmatprep.subr.mxu0 0.0
    %545 = vmatpush1.msra.mxu0 0.0
    %546 = vmatprep.subr.mxu0 0.0
    %547 = vmatpush1.msra.mxu0 0.0
    %548 = vmatprep.subr.mxu0 0.0
    %549 = vmatpush1.msra.mxu0 0.0
    %550 = vmatprep.subr.mxu0 0.0
    %551 = vmatpush1.msra.mxu0 0.0
    %552 = vmatprep.subr.mxu0 0.0
    %553 = vmatpush1.msra.mxu0 0.0
    %554 = vmatprep.subr.mxu0 0.0
    %555 = vmatpush1.msra.mxu0 0.0
    %556 = vmatprep.subr.mxu0 0.0
    %557 = vmatpush1.msra.mxu0 0.0
    %558 = vmatprep.mubr.f32.mxu0 0.0
    %559 = vmatmul.mubr.f32.gmra.mrb[0].mxu0 %v492
    %v560 = vpop.f32.mrb[0].mxu0
    %v561 = vadd.f32 0.0, %v560
    %v562 = vpop.f32.mrb[0].mxu0
    %563 = vdwg.mxu0
    %564 = vrot.lane.b32.xlu0 %v199, 120
    %v565 = vpop.permute.xlu0 %564
    %566 = vrot.lane.b32.xlu0 %v299, 120
    %v567 = vpop.permute.xlu0 %566
    %v568 = vsel %vm403, %v565, 0
    %v570 = vsel %vm403, %v567, 0
    %572 = vmatprep.subr.mxu0 0.0
    %573 = vmatpush1.xpose.msra.mxu0 %v570
    %574 = vmatprep.subr.mxu0 0.0
    %575 = vmatpush1.xpose.msra.mxu0 0.0
    %576 = vmatprep.subr.mxu0 0.0
    %577 = vmatpush1.xpose.msra.mxu0 0.0
    %578 = vmatprep.subr.mxu0 0.0
    %579 = vmatpush1.xpose.msra.mxu0 0.0
    %580 = vmatprep.subr.mxu0 0.0
    %581 = vmatpush1.xpose.msra.mxu0 0.0
    %582 = vmatprep.subr.mxu0 0.0
    %583 = vmatpush1.xpose.msra.mxu0 0.0
    %584 = vmatprep.subr.mxu0 0.0
    %585 = vmatpush1.xpose.msra.mxu0 0.0
    %586 = vmatprep.subr.mxu0 0.0
    %587 = vmatpush1.xpose.msra.mxu0 0.0
    %588 = vmatprep.subr.mxu0 0.0
    %589 = vmatpush1.xpose.msra.mxu0 0.0
    %590 = vmatprep.subr.mxu0 0.0
    %591 = vmatpush1.xpose.msra.mxu0 0.0
    %592 = vmatprep.subr.mxu0 0.0
    %593 = vmatpush1.xpose.msra.mxu0 0.0
    %594 = vmatprep.subr.mxu0 0.0
    %595 = vmatpush1.xpose.msra.mxu0 0.0
    %596 = vmatprep.subr.mxu0 0.0
    %597 = vmatpush1.xpose.msra.mxu0 0.0
    %598 = vmatprep.subr.mxu0 0.0
    %599 = vmatpush1.xpose.msra.mxu0 0.0
    %600 = vmatprep.subr.mxu0 0.0
    %601 = vmatpush1.xpose.msra.mxu0 0.0
    %602 = vmatprep.subr.mxu0 0.0
    %603 = vmatpush1.xpose.msra.mxu0 0.0
    %604 = vmatprep.subr.mxu0 0.0
    %605 = vmatpush1.xpose.msra.mxu0 0.0
    %606 = vmatprep.subr.mxu0 0.0
    %607 = vmatpush1.xpose.msra.mxu0 0.0
    %608 = vmatprep.subr.mxu0 0.0
    %609 = vmatpush1.xpose.msra.mxu0 0.0
    %610 = vmatprep.subr.mxu0 0.0
    %611 = vmatpush1.xpose.msra.mxu0 0.0
    %612 = vmatprep.subr.mxu0 0.0
    %613 = vmatpush1.xpose.msra.mxu0 0.0
    %614 = vmatprep.subr.mxu0 0.0
    %615 = vmatpush1.xpose.msra.mxu0 0.0
    %616 = vmatprep.subr.mxu0 0.0
    %617 = vmatpush1.xpose.msra.mxu0 0.0
    %618 = vmatprep.subr.mxu0 0.0
    %619 = vmatpush1.xpose.msra.mxu0 0.0
    %620 = vmatprep.subr.mxu0 0.0
    %621 = vmatpush1.xpose.msra.mxu0 0.0
    %622 = vmatprep.subr.mxu0 0.0
    %623 = vmatpush1.xpose.msra.mxu0 0.0
    %624 = vmatprep.subr.mxu0 0.0
    %625 = vmatpush1.xpose.msra.mxu0 0.0
    %626 = vmatprep.subr.mxu0 0.0
    %627 = vmatpush1.xpose.msra.mxu0 0.0
    %628 = vmatprep.subr.mxu0 0.0
    %629 = vmatpush1.xpose.msra.mxu0 0.0
    %630 = vmatprep.subr.mxu0 0.0
    %631 = vmatpush1.xpose.msra.mxu0 0.0
    %632 = vmatprep.subr.mxu0 0.0
    %633 = vmatpush1.xpose.msra.mxu0 0.0
    %634 = vmatprep.subr.mxu0 0.0
    %635 = vmatpush1.xpose.msra.mxu0 0.0
    %636 = vmatprep.mubr.f32.mxu0 0.0
    %637 = vmatmul.mubr.f32.gmra.mrb[0].mxu0 %v568
    %v638 = vpop.f32.mrb[0].mxu0
    %v639 = vadd.f32 0.0, %v638
    %v640 = vpop.f32.mrb[0].mxu0
    %641 = vdwg.mxu0
    %v642 = vsel %vm403, %v639, -inf
    %643 = vmax.xlane.f32.xlu0 %v642
    %v644 = vpop.xlane.xlu0 %643
    %v645 = vsub.f32 %v639, %v644
    %v646 = vmul.f32 %v645, 1.442695
    %v647 = vpow.pop %v646
    %v648 = vsel %vm403, %v647, 0.0
    %649 = vadd.xlane.f32.xlu0 %v648
    %v650 = vpop.xlane.xlu0 %649
    %v651 = vrcp.pop %v650
    %v652 = vmul.f32 %v647, %v651
    %654 = vrot.lane.b32.xlu0 %v395, 120
    %v655 = vpop.permute.xlu0 %654
    %v658 = vsel %vm403, %v652, 0
    %660 = vmatprep.subr.mxu0 0.0
    %661 = vmatpush1.msra.mxu0 %v655
    %662 = vmatprep.subr.mxu0 0.0
    %663 = vmatpush1.msra.mxu0 0.0
    %664 = vmatprep.subr.mxu0 0.0
    %665 = vmatpush1.msra.mxu0 0.0
    %666 = vmatprep.subr.mxu0 0.0
    %667 = vmatpush1.msra.mxu0 0.0
    %668 = vmatprep.subr.mxu0 0.0
    %669 = vmatpush1.msra.mxu0 0.0
    %670 = vmatprep.subr.mxu0 0.0
    %671 = vmatpush1.msra.mxu0 0.0
    %672 = vmatprep.subr.mxu0 0.0
    %673 = vmatpush1.msra.mxu0 0.0
    %674 = vmatprep.subr.mxu0 0.0
    %675 = vmatpush1.msra.mxu0 0.0
    %676 = vmatprep.subr.mxu0 0.0
    %677 = vmatpush1.msra.mxu0 0.0
    %678 = vmatprep.subr.mxu0 0.0
    %679 = vmatpush1.msra.mxu0 0.0
    %680 = vmatprep.subr.mxu0 0.0
    %681 = vmatpush1.msra.mxu0 0.0
    %682 = vmatprep.subr.mxu0 0.0
    %683 = vmatpush1.msra.mxu0 0.0
    %684 = vmatprep.subr.mxu0 0.0
    %685 = vmatpush1.msra.mxu0 0.0
    %686 = vmatprep.subr.mxu0 0.0
    %687 = vmatpush1.msra.mxu0 0.0
    %688 = vmatprep.subr.mxu0 0.0
    %689 = vmatpush1.msra.mxu0 0.0
    %690 = vmatprep.subr.mxu0 0.0
    %691 = vmatpush1.msra.mxu0 0.0
    %692 = vmatprep.subr.mxu0 0.0
    %693 = vmatpush1.msra.mxu0 0.0
    %694 = vmatprep.subr.mxu0 0.0
    %695 = vmatpush1.msra.mxu0 0.0
    %696 = vmatprep.subr.mxu0 0.0
    %697 = vmatpush1.msra.mxu0 0.0
    %698 = vmatprep.subr.mxu0 0.0
    %699 = vmatpush1.msra.mxu0 0.0
    %700 = vmatprep.subr.mxu0 0.0
    %701 = vmatpush1.msra.mxu0 0.0
    %702 = vmatprep.subr.mxu0 0.0
    %703 = vmatpush1.msra.mxu0 0.0
    %704 = vmatprep.subr.mxu0 0.0
    %705 = vmatpush1.msra.mxu0 0.0
    %706 = vmatprep.subr.mxu0 0.0
    %707 = vmatpush1.msra.mxu0 0.0
    %708 = vmatprep.subr.mxu0 0.0
    %709 = vmatpush1.msra.mxu0 0.0
    %710 = vmatprep.subr.mxu0 0.0
    %711 = vmatpush1.msra.mxu0 0.0
    %712 = vmatprep.subr.mxu0 0.0
    %713 = vmatpush1.msra.mxu0 0.0
    %714 = vmatprep.subr.mxu0 0.0
    %715 = vmatpush1.msra.mxu0 0.0
    %716 = vmatprep.subr.mxu0 0.0
    %717 = vmatpush1.msra.mxu0 0.0
    %718 = vmatprep.subr.mxu0 0.0
    %719 = vmatpush1.msra.mxu0 0.0
    %720 = vmatprep.subr.mxu0 0.0
    %721 = vmatpush1.msra.mxu0 0.0
    %722 = vmatprep.subr.mxu0 0.0
    %723 = vmatpush1.msra.mxu0 0.0
    %724 = vmatprep.mubr.f32.mxu0 0.0
    %725 = vmatmul.mubr.f32.gmra.mrb[0].mxu0 %v658
    %v726 = vpop.f32.mrb[0].mxu0
    %v727 = vadd.f32 0.0, %v726
    %v728 = vpop.f32.mrb[0].mxu0
    %729 = vdwg.mxu0
    %v731 = vsel %vm403, %v727, 0
    %733 = vmatprep.subr.mxu0 0.0
    %734 = vmatpush1.msra.mxu0 %v107
    %735 = vmatprep.subr.mxu0 0.0
    %736 = vmatpush1.msra.mxu0 0.0
    %737 = vmatprep.subr.mxu0 0.0
    %738 = vmatpush1.msra.mxu0 0.0
    %739 = vmatprep.subr.mxu0 0.0
    %740 = vmatpush1.msra.mxu0 0.0
    %741 = vmatprep.subr.mxu0 0.0
    %742 = vmatpush1.msra.mxu0 0.0
    %743 = vmatprep.subr.mxu0 0.0
    %744 = vmatpush1.msra.mxu0 0.0
    %745 = vmatprep.subr.mxu0 0.0
    %746 = vmatpush1.msra.mxu0 0.0
    %747 = vmatprep.subr.mxu0 0.0
    %748 = vmatpush1.msra.mxu0 0.0
    %749 = vmatprep.subr.mxu0 0.0
    %750 = vmatpush1.msra.mxu0 0.0
    %751 = vmatprep.subr.mxu0 0.0
    %752 = vmatpush1.msra.mxu0 0.0
    %753 = vmatprep.subr.mxu0 0.0
    %754 = vmatpush1.msra.mxu0 0.0
    %755 = vmatprep.subr.mxu0 0.0
    %756 = vmatpush1.msra.mxu0 0.0
    %757 = vmatprep.subr.mxu0 0.0
    %758 = vmatpush1.msra.mxu0 0.0
    %759 = vmatprep.subr.mxu0 0.0
    %760 = vmatpush1.msra.mxu0 0.0
    %761 = vmatprep.subr.mxu0 0.0
    %762 = vmatpush1.msra.mxu0 0.0
    %763 = vmatprep.subr.mxu0 0.0
    %764 = vmatpush1.msra.mxu0 0.0
    %765 = vmatprep.subr.mxu0 0.0
    %766 = vmatpush1.msra.mxu0 0.0
    %767 = vmatprep.subr.mxu0 0.0
    %768 = vmatpush1.msra.mxu0 0.0
    %769 = vmatprep.subr.mxu0 0.0
    %770 = vmatpush1.msra.mxu0 0.0
    %771 = vmatprep.subr.mxu0 0.0
    %772 = vmatpush1.msra.mxu0 0.0
    %773 = vmatprep.subr.mxu0 0.0
    %774 = vmatpush1.msra.mxu0 0.0
    %775 = vmatprep.subr.mxu0 0.0
    %776 = vmatpush1.msra.mxu0 0.0
    %777 = vmatprep.subr.mxu0 0.0
    %778 = vmatpush1.msra.mxu0 0.0
    %779 = vmatprep.subr.mxu0 0.0
    %780 = vmatpush1.msra.mxu0 0.0
    %781 = vmatprep.subr.mxu0 0.0
    %782 = vmatpush1.msra.mxu0 0.0
    %783 = vmatprep.subr.mxu0 0.0
    %784 = vmatpush1.msra.mxu0 0.0
    %785 = vmatprep.subr.mxu0 0.0
    %786 = vmatpush1.msra.mxu0 0.0
    %787 = vmatprep.subr.mxu0 0.0
    %788 = vmatpush1.msra.mxu0 0.0
    %789 = vmatprep.subr.mxu0 0.0
    %790 = vmatpush1.msra.mxu0 0.0
    %791 = vmatprep.subr.mxu0 0.0
    %792 = vmatpush1.msra.mxu0 0.0
    %793 = vmatprep.subr.mxu0 0.0
    %794 = vmatpush1.msra.mxu0 0.0
    %795 = vmatprep.subr.mxu0 0.0
    %796 = vmatpush1.msra.mxu0 0.0
    %797 = vmatprep.mubr.f32.mxu0 0.0
    %798 = vmatmul.mubr.f32.gmra.mrb[0].mxu0 %v731
    %v799 = vpop.f32.mrb[0].mxu0
    %v800 = vadd.f32 0.0, %v799
    %v801 = vpop.f32.mrb[0].mxu0
    %802 = vdwg.mxu0
    %v804 = vsel %vm403, %v561, 0
    %806 = vmatprep.subr.mxu0 0.0
    %807 = vmatpush1.msra.mxu0 %v106
    %808 = vmatprep.subr.mxu0 0.0
    %809 = vmatpush1.msra.mxu0 0.0
    %810 = vmatprep.subr.mxu0 0.0
    %811 = vmatpush1.msra.mxu0 0.0
    %812 = vmatprep.subr.mxu0 0.0
    %813 = vmatpush1.msra.mxu0 0.0
    %814 = vmatprep.subr.mxu0 0.0
    %815 = vmatpush1.msra.mxu0 0.0
    %816 = vmatprep.subr.mxu0 0.0
    %817 = vmatpush1.msra.mxu0 0.0
    %818 = vmatprep.subr.mxu0 0.0
    %819 = vmatpush1.msra.mxu0 0.0
    %820 = vmatprep.subr.mxu0 0.0
    %821 = vmatpush1.msra.mxu0 0.0
    %822 = vmatprep.subr.mxu0 0.0
    %823 = vmatpush1.msra.mxu0 0.0
    %824 = vmatprep.subr.mxu0 0.0
    %825 = vmatpush1.msra.mxu0 0.0
    %826 = vmatprep.subr.mxu0 0.0
    %827 = vmatpush1.msra.mxu0 0.0
    %828 = vmatprep.subr.mxu0 0.0
    %829 = vmatpush1.msra.mxu0 0.0
    %830 = vmatprep.subr.mxu0 0.0
    %831 = vmatpush1.msra.mxu0 0.0
    %832 = vmatprep.subr.mxu0 0.0
    %833 = vmatpush1.msra.mxu0 0.0
    %834 = vmatprep.subr.mxu0 0.0
    %835 = vmatpush1.msra.mxu0 0.0
    %836 = vmatprep.subr.mxu0 0.0
    %837 = vmatpush1.msra.mxu0 0.0
    %838 = vmatprep.subr.mxu0 0.0
    %839 = vmatpush1.msra.mxu0 0.0
    %840 = vmatprep.subr.mxu0 0.0
    %841 = vmatpush1.msra.mxu0 0.0
    %842 = vmatprep.subr.mxu0 0.0
    %843 = vmatpush1.msra.mxu0 0.0
    %844 = vmatprep.subr.mxu0 0.0
    %845 = vmatpush1.msra.mxu0 0.0
    %846 = vmatprep.subr.mxu0 0.0
    %847 = vmatpush1.msra.mxu0 0.0
    %848 = vmatprep.subr.mxu0 0.0
    %849 = vmatpush1.msra.mxu0 0.0
    %850 = vmatprep.subr.mxu0 0.0
    %851 = vmatpush1.msra.mxu0 0.0
    %852 = vmatprep.subr.mxu0 0.0
    %853 = vmatpush1.msra.mxu0 0.0
    %854 = vmatprep.subr.mxu0 0.0
    %855 = vmatpush1.msra.mxu0 0.0
    %856 = vmatprep.subr.mxu0 0.0
    %857 = vmatpush1.msra.mxu0 0.0
    %858 = vmatprep.subr.mxu0 0.0
    %859 = vmatpush1.msra.mxu0 0.0
    %860 = vmatprep.subr.mxu0 0.0
    %861 = vmatpush1.msra.mxu0 0.0
    %862 = vmatprep.subr.mxu0 0.0
    %863 = vmatpush1.msra.mxu0 0.0
    %864 = vmatprep.subr.mxu0 0.0
    %865 = vmatpush1.msra.mxu0 0.0
    %866 = vmatprep.subr.mxu0 0.0
    %867 = vmatpush1.msra.mxu0 0.0
    %868 = vmatprep.subr.mxu0 0.0
    %869 = vmatpush1.msra.mxu0 0.0
    %870 = vmatprep.mubr.f32.mxu0 0.0
    %871 = vmatmul.mubr.f32.gmra.mrb[0].mxu0 %v804
    %v872 = vpop.f32.mrb[0].mxu0
    %v873 = vadd.f32 %v800, %v872
    %v874 = vpop.f32.mrb[0].mxu0
    %875 = vdwg.mxu0
    %876 = vrot.lane.b32.xlu0 %v199, 112
    %v877 = vpop.permute.xlu0 %876
    %878 = vrot.lane.b32.xlu0 %v299, 112
    %v879 = vpop.permute.xlu0 %878
    %v880 = vsel %vm403, %v877, 0
    %v882 = vsel %vm403, %v879, 0
    %884 = vmatprep.subr.mxu0 0.0
    %885 = vmatpush1.xpose.msra.mxu0 %v882
    %886 = vmatprep.subr.mxu0 0.0
    %887 = vmatpush1.xpose.msra.mxu0 0.0
    %888 = vmatprep.subr.mxu0 0.0
    %889 = vmatpush1.xpose.msra.mxu0 0.0
    %890 = vmatprep.subr.mxu0 0.0
    %891 = vmatpush1.xpose.msra.mxu0 0.0
    %892 = vmatprep.subr.mxu0 0.0
    %893 = vmatpush1.xpose.msra.mxu0 0.0
    %894 = vmatprep.subr.mxu0 0.0
    %895 = vmatpush1.xpose.msra.mxu0 0.0
    %896 = vmatprep.subr.mxu0 0.0
    %897 = vmatpush1.xpose.msra.mxu0 0.0
    %898 = vmatprep.subr.mxu0 0.0
    %899 = vmatpush1.xpose.msra.mxu0 0.0
    %900 = vmatprep.subr.mxu0 0.0
    %901 = vmatpush1.xpose.msra.mxu0 0.0
    %902 = vmatprep.subr.mxu0 0.0
    %903 = vmatpush1.xpose.msra.mxu0 0.0
    %904 = vmatprep.subr.mxu0 0.0
    %905 = vmatpush1.xpose.msra.mxu0 0.0
    %906 = vmatprep.subr.mxu0 0.0
    %907 = vmatpush1.xpose.msra.mxu0 0.0
    %908 = vmatprep.subr.mxu0 0.0
    %909 = vmatpush1.xpose.msra.mxu0 0.0
    %910 = vmatprep.subr.mxu0 0.0
    %911 = vmatpush1.xpose.msra.mxu0 0.0
    %912 = vmatprep.subr.mxu0 0.0
    %913 = vmatpush1.xpose.msra.mxu0 0.0
    %914 = vmatprep.subr.mxu0 0.0
    %915 = vmatpush1.xpose.msra.mxu0 0.0
    %916 = vmatprep.subr.mxu0 0.0
    %917 = vmatpush1.xpose.msra.mxu0 0.0
    %918 = vmatprep.subr.mxu0 0.0
    %919 = vmatpush1.xpose.msra.mxu0 0.0
    %920 = vmatprep.subr.mxu0 0.0
    %921 = vmatpush1.xpose.msra.mxu0 0.0
    %922 = vmatprep.subr.mxu0 0.0
    %923 = vmatpush1.xpose.msra.mxu0 0.0
    %924 = vmatprep.subr.mxu0 0.0
    %925 = vmatpush1.xpose.msra.mxu0 0.0
    %926 = vmatprep.subr.mxu0 0.0
    %927 = vmatpush1.xpose.msra.mxu0 0.0
    %928 = vmatprep.subr.mxu0 0.0
    %929 = vmatpush1.xpose.msra.mxu0 0.0
    %930 = vmatprep.subr.mxu0 0.0
    %931 = vmatpush1.xpose.msra.mxu0 0.0
    %932 = vmatprep.subr.mxu0 0.0
    %933 = vmatpush1.xpose.msra.mxu0 0.0
    %934 = vmatprep.subr.mxu0 0.0
    %935 = vmatpush1.xpose.msra.mxu0 0.0
    %936 = vmatprep.subr.mxu0 0.0
    %937 = vmatpush1.xpose.msra.mxu0 0.0
    %938 = vmatprep.subr.mxu0 0.0
    %939 = vmatpush1.xpose.msra.mxu0 0.0
    %940 = vmatprep.subr.mxu0 0.0
    %941 = vmatpush1.xpose.msra.mxu0 0.0
    %942 = vmatprep.subr.mxu0 0.0
    %943 = vmatpush1.xpose.msra.mxu0 0.0
    %944 = vmatprep.subr.mxu0 0.0
    %945 = vmatpush1.xpose.msra.mxu0 0.0
    %946 = vmatprep.subr.mxu0 0.0
    %947 = vmatpush1.xpose.msra.mxu0 0.0
    %948 = vmatprep.mubr.f32.mxu0 0.0
    %949 = vmatmul.mubr.f32.gmra.mrb[0].mxu0 %v880
    %v950 = vpop.f32.mrb[0].mxu0
    %v951 = vadd.f32 0.0, %v950
    %v952 = vpop.f32.mrb[0].mxu0
    %953 = vdwg.mxu0
    %v954 = vsel %vm403, %v951, -inf
    %955 = vmax.xlane.f32.xlu0 %v954
    %v956 = vpop.xlane.xlu0 %955
    %v957 = vsub.f32 %v951, %v956
    %v958 = vmul.f32 %v957, 1.442695
    %v959 = vpow.pop %v958
    %v960 = vsel %vm403, %v959, 0.0
    %961 = vadd.xlane.f32.xlu0 %v960
    %v962 = vpop.xlane.xlu0 %961
    %v963 = vrcp.pop %v962
    %v964 = vmul.f32 %v959, %v963
    %965 = vrot.lane.b32.xlu0 %v395, 112
    %v966 = vpop.permute.xlu0 %965
    %v969 = vsel %vm403, %v964, 0
    %971 = vmatprep.subr.mxu0 0.0
    %972 = vmatpush1.msra.mxu0 %v966
    %973 = vmatprep.subr.mxu0 0.0
    %974 = vmatpush1.msra.mxu0 0.0
    %975 = vmatprep.subr.mxu0 0.0
    %976 = vmatpush1.msra.mxu0 0.0
    %977 = vmatprep.subr.mxu0 0.0
    %978 = vmatpush1.msra.mxu0 0.0
    %979 = vmatprep.subr.mxu0 0.0
    %980 = vmatpush1.msra.mxu0 0.0
    %981 = vmatprep.subr.mxu0 0.0
    %982 = vmatpush1.msra.mxu0 0.0
    %983 = vmatprep.subr.mxu0 0.0
    %984 = vmatpush1.msra.mxu0 0.0
    %985 = vmatprep.subr.mxu0 0.0
    %986 = vmatpush1.msra.mxu0 0.0
    %987 = vmatprep.subr.mxu0 0.0
    %988 = vmatpush1.msra.mxu0 0.0
    %989 = vmatprep.subr.mxu0 0.0
    %990 = vmatpush1.msra.mxu0 0.0
    %991 = vmatprep.subr.mxu0 0.0
    %992 = vmatpush1.msra.mxu0 0.0
    %993 = vmatprep.subr.mxu0 0.0
    %994 = vmatpush1.msra.mxu0 0.0
    %995 = vmatprep.subr.mxu0 0.0
    %996 = vmatpush1.msra.mxu0 0.0
    %997 = vmatprep.subr.mxu0 0.0
    %998 = vmatpush1.msra.mxu0 0.0
    %999 = vmatprep.subr.mxu0 0.0
    %1000 = vmatpush1.msra.mxu0 0.0
    %1001 = vmatprep.subr.mxu0 0.0
    %1002 = vmatpush1.msra.mxu0 0.0
    %1003 = vmatprep.subr.mxu0 0.0
    %1004 = vmatpush1.msra.mxu0 0.0
    %1005 = vmatprep.subr.mxu0 0.0
    %1006 = vmatpush1.msra.mxu0 0.0
    %1007 = vmatprep.subr.mxu0 0.0
    %1008 = vmatpush1.msra.mxu0 0.0
    %1009 = vmatprep.subr.mxu0 0.0
    %1010 = vmatpush1.msra.mxu0 0.0
    %1011 = vmatprep.subr.mxu0 0.0
    %1012 = vmatpush1.msra.mxu0 0.0
    %1013 = vmatprep.subr.mxu0 0.0
    %1014 = vmatpush1.msra.mxu0 0.0
    %1015 = vmatprep.subr.mxu0 0.0
    %1016 = vmatpush1.msra.mxu0 0.0
    %1017 = vmatprep.subr.mxu0 0.0
    %1018 = vmatpush1.msra.mxu0 0.0
    %1019 = vmatprep.subr.mxu0 0.0
    %1020 = vmatpush1.msra.mxu0 0.0
    %1021 = vmatprep.subr.mxu0 0.0
    %1022 = vmatpush1.msra.mxu0 0.0
    %1023 = vmatprep.subr.mxu0 0.0
    %1024 = vmatpush1.msra.mxu0 0.0
    %1025 = vmatprep.subr.mxu0 0.0
    %1026 = vmatpush1.msra.mxu0 0.0
    %1027 = vmatprep.subr.mxu0 0.0
    %1028 = vmatpush1.msra.mxu0 0.0
    %1029 = vmatprep.subr.mxu0 0.0
    %1030 = vmatpush1.msra.mxu0 0.0
    %1031 = vmatprep.subr.mxu0 0.0
    %1032 = vmatpush1.msra.mxu0 0.0
    %1033 = vmatprep.subr.mxu0 0.0
    %1034 = vmatpush1.msra.mxu0 0.0
    %1035 = vmatprep.mubr.f32.mxu0 0.0
    %1036 = vmatmul.mubr.f32.gmra.mrb[0].mxu0 %v969
    %v1037 = vpop.f32.mrb[0].mxu0
    %v1038 = vadd.f32 0.0, %v1037
    %v1039 = vpop.f32.mrb[0].mxu0
    %1040 = vdwg.mxu0
    %v1042 = vsel %vm403, %v1038, 0
    %1044 = vmatprep.subr.mxu0 0.0
    %1045 = vmatpush1.msra.mxu0 %v108
    %1046 = vmatprep.subr.mxu0 0.0
    %1047 = vmatpush1.msra.mxu0 0.0
    %1048 = vmatprep.subr.mxu0 0.0
    %1049 = vmatpush1.msra.mxu0 0.0
    %1050 = vmatprep.subr.mxu0 0.0
    %1051 = vmatpush1.msra.mxu0 0.0
    %1052 = vmatprep.subr.mxu0 0.0
    %1053 = vmatpush1.msra.mxu0 0.0
    %1054 = vmatprep.subr.mxu0 0.0
    %1055 = vmatpush1.msra.mxu0 0.0
    %1056 = vmatprep.subr.mxu0 0.0
    %1057 = vmatpush1.msra.mxu0 0.0
    %1058 = vmatprep.subr.mxu0 0.0
    %1059 = vmatpush1.msra.mxu0 0.0
    %1060 = vmatprep.subr.mxu0 0.0
    %1061 = vmatpush1.msra.mxu0 0.0
    %1062 = vmatprep.subr.mxu0 0.0
    %1063 = vmatpush1.msra.mxu0 0.0
    %1064 = vmatprep.subr.mxu0 0.0
    %1065 = vmatpush1.msra.mxu0 0.0
    %1066 = vmatprep.subr.mxu0 0.0
    %1067 = vmatpush1.msra.mxu0 0.0
    %1068 = vmatprep.subr.mxu0 0.0
    %1069 = vmatpush1.msra.mxu0 0.0
    %1070 = vmatprep.subr.mxu0 0.0
    %1071 = vmatpush1.msra.mxu0 0.0
    %1072 = vmatprep.subr.mxu0 0.0
    %1073 = vmatpush1.msra.mxu0 0.0
    %1074 = vmatprep.subr.mxu0 0.0
    %1075 = vmatpush1.msra.mxu0 0.0
    %1076 = vmatprep.subr.mxu0 0.0
    %1077 = vmatpush1.msra.mxu0 0.0
    %1078 = vmatprep.subr.mxu0 0.0
    %1079 = vmatpush1.msra.mxu0 0.0
    %1080 = vmatprep.subr.mxu0 0.0
    %1081 = vmatpush1.msra.mxu0 0.0
    %1082 = vmatprep.subr.mxu0 0.0
    %1083 = vmatpush1.msra.mxu0 0.0
    %1084 = vmatprep.subr.mxu0 0.0
    %1085 = vmatpush1.msra.mxu0 0.0
    %1086 = vmatprep.subr.mxu0 0.0
    %1087 = vmatpush1.msra.mxu0 0.0
    %1088 = vmatprep.subr.mxu0 0.0
    %1089 = vmatpush1.msra.mxu0 0.0
    %1090 = vmatprep.subr.mxu0 0.0
    %1091 = vmatpush1.msra.mxu0 0.0
    %1092 = vmatprep.subr.mxu0 0.0
    %1093 = vmatpush1.msra.mxu0 0.0
    %1094 = vmatprep.subr.mxu0 0.0
    %1095 = vmatpush1.msra.mxu0 0.0
    %1096 = vmatprep.subr.mxu0 0.0
    %1097 = vmatpush1.msra.mxu0 0.0
    %1098 = vmatprep.subr.mxu0 0.0
    %1099 = vmatpush1.msra.mxu0 0.0
    %1100 = vmatprep.subr.mxu0 0.0
    %1101 = vmatpush1.msra.mxu0 0.0
    %1102 = vmatprep.subr.mxu0 0.0
    %1103 = vmatpush1.msra.mxu0 0.0
    %1104 = vmatprep.subr.mxu0 0.0
    %1105 = vmatpush1.msra.mxu0 0.0
    %1106 = vmatprep.subr.mxu0 0.0
    %1107 = vmatpush1.msra.mxu0 0.0
    %1108 = vmatprep.mubr.f32.mxu0 0.0
    %1109 = vmatmul.mubr.f32.gmra.mrb[0].mxu0 %v1042
    %v1110 = vpop.f32.mrb[0].mxu0
    %v1111 = vadd.f32 0.0, %v1110
    %v1112 = vpop.f32.mrb[0].mxu0
    %1113 = vdwg.mxu0
    %v1114 = vadd.f32 %v873, %v1111
    %1115 = vrot.lane.b32.xlu0 %v199, 104
    %v1116 = vpop.permute.xlu0 %1115
    %1117 = vrot.lane.b32.xlu0 %v299, 104
    %v1118 = vpop.permute.xlu0 %1117
    %v1119 = vsel %vm403, %v1116, 0
    %v1121 = vsel %vm403, %v1118, 0
    %1123 = vmatprep.subr.mxu0 0.0
    %1124 = vmatpush1.xpose.msra.mxu0 %v1121
    %1125 = vmatprep.subr.mxu0 0.0
    %1126 = vmatpush1.xpose.msra.mxu0 0.0
    %1127 = vmatprep.subr.mxu0 0.0
    %1128 = vmatpush1.xpose.msra.mxu0 0.0
    %1129 = vmatprep.subr.mxu0 0.0
    %1130 = vmatpush1.xpose.msra.mxu0 0.0
    %1131 = vmatprep.subr.mxu0 0.0
    %1132 = vmatpush1.xpose.msra.mxu0 0.0
    %1133 = vmatprep.subr.mxu0 0.0
    %1134 = vmatpush1.xpose.msra.mxu0 0.0
    %1135 = vmatprep.subr.mxu0 0.0
    %1136 = vmatpush1.xpose.msra.mxu0 0.0
    %1137 = vmatprep.subr.mxu0 0.0
    %1138 = vmatpush1.xpose.msra.mxu0 0.0
    %1139 = vmatprep.subr.mxu0 0.0
    %1140 = vmatpush1.xpose.msra.mxu0 0.0
    %1141 = vmatprep.subr.mxu0 0.0
    %1142 = vmatpush1.xpose.msra.mxu0 0.0
    %1143 = vmatprep.subr.mxu0 0.0
    %1144 = vmatpush1.xpose.msra.mxu0 0.0
    %1145 = vmatprep.subr.mxu0 0.0
    %1146 = vmatpush1.xpose.msra.mxu0 0.0
    %1147 = vmatprep.subr.mxu0 0.0
    %1148 = vmatpush1.xpose.msra.mxu0 0.0
    %1149 = vmatprep.subr.mxu0 0.0
    %1150 = vmatpush1.xpose.msra.mxu0 0.0
    %1151 = vmatprep.subr.mxu0 0.0
    %1152 = vmatpush1.xpose.msra.mxu0 0.0
    %1153 = vmatprep.subr.mxu0 0.0
    %1154 = vmatpush1.xpose.msra.mxu0 0.0
    %1155 = vmatprep.subr.mxu0 0.0
    %1156 = vmatpush1.xpose.msra.mxu0 0.0
    %1157 = vmatprep.subr.mxu0 0.0
    %1158 = vmatpush1.xpose.msra.mxu0 0.0
    %1159 = vmatprep.subr.mxu0 0.0
    %1160 = vmatpush1.xpose.msra.mxu0 0.0
    %1161 = vmatprep.subr.mxu0 0.0
    %1162 = vmatpush1.xpose.msra.mxu0 0.0
    %1163 = vmatprep.subr.mxu0 0.0
    %1164 = vmatpush1.xpose.msra.mxu0 0.0
    %1165 = vmatprep.subr.mxu0 0.0
    %1166 = vmatpush1.xpose.msra.mxu0 0.0
    %1167 = vmatprep.subr.mxu0 0.0
    %1168 = vmatpush1.xpose.msra.mxu0 0.0
    %1169 = vmatprep.subr.mxu0 0.0
    %1170 = vmatpush1.xpose.msra.mxu0 0.0
    %1171 = vmatprep.subr.mxu0 0.0
    %1172 = vmatpush1.xpose.msra.mxu0 0.0
    %1173 = vmatprep.subr.mxu0 0.0
    %1174 = vmatpush1.xpose.msra.mxu0 0.0
    %1175 = vmatprep.subr.mxu0 0.0
    %1176 = vmatpush1.xpose.msra.mxu0 0.0
    %1177 = vmatprep.subr.mxu0 0.0
    %1178 = vmatpush1.xpose.msra.mxu0 0.0
    %1179 = vmatprep.subr.mxu0 0.0
    %1180 = vmatpush1.xpose.msra.mxu0 0.0
    %1181 = vmatprep.subr.mxu0 0.0
    %1182 = vmatpush1.xpose.msra.mxu0 0.0
    %1183 = vmatprep.subr.mxu0 0.0
    %1184 = vmatpush1.xpose.msra.mxu0 0.0
    %1185 = vmatprep.subr.mxu0 0.0
    %1186 = vmatpush1.xpose.msra.mxu0 0.0
    %1187 = vmatprep.mubr.f32.mxu0 0.0
    %1188 = vmatmul.mubr.f32.gmra.mrb[0].mxu0 %v1119
    %v1189 = vpop.f32.mrb[0].mxu0
    %v1190 = vadd.f32 0.0, %v1189
    %v1191 = vpop.f32.mrb[0].mxu0
    %1192 = vdwg.mxu0
    %v1193 = vsel %vm403, %v1190, -inf
    %1194 = vmax.xlane.f32.xlu0 %v1193
    %v1195 = vpop.xlane.xlu0 %1194
    %v1196 = vsub.f32 %v1190, %v1195
    %v1197 = vmul.f32 %v1196, 1.442695
    %v1198 = vpow.pop %v1197
    %v1199 = vsel %vm403, %v1198, 0.0
    %1200 = vadd.xlane.f32.xlu0 %v1199
    %v1201 = vpop.xlane.xlu0 %1200
    %v1202 = vrcp.pop %v1201
    %v1203 = vmul.f32 %v1198, %v1202
    %1204 = vrot.lane.b32.xlu0 %v395, 104
    %v1205 = vpop.permute.xlu0 %1204
    %v1208 = vsel %vm403, %v1203, 0
    %1210 = vmatprep.subr.mxu0 0.0
    %1211 = vmatpush1.msra.mxu0 %v1205
    %1212 = vmatprep.subr.mxu0 0.0
    %1213 = vmatpush1.msra.mxu0 0.0
    %1214 = vmatprep.subr.mxu0 0.0
    %1215 = vmatpush1.msra.mxu0 0.0
    %1216 = vmatprep.subr.mxu0 0.0
    %1217 = vmatpush1.msra.mxu0 0.0
    %1218 = vmatprep.subr.mxu0 0.0
    %1219 = vmatpush1.msra.mxu0 0.0
    %1220 = vmatprep.subr.mxu0 0.0
    %1221 = vmatpush1.msra.mxu0 0.0
    %1222 = vmatprep.subr.mxu0 0.0
    %1223 = vmatpush1.msra.mxu0 0.0
    %1224 = vmatprep.subr.mxu0 0.0
    %1225 = vmatpush1.msra.mxu0 0.0
    %1226 = vmatprep.subr.mxu0 0.0
    %1227 = vmatpush1.msra.mxu0 0.0
    %1228 = vmatprep.subr.mxu0 0.0
    %1229 = vmatpush1.msra.mxu0 0.0
    %1230 = vmatprep.subr.mxu0 0.0
    %1231 = vmatpush1.msra.mxu0 0.0
    %1232 = vmatprep.subr.mxu0 0.0
    %1233 = vmatpush1.msra.mxu0 0.0
    %1234 = vmatprep.subr.mxu0 0.0
    %1235 = vmatpush1.msra.mxu0 0.0
    %1236 = vmatprep.subr.mxu0 0.0
    %1237 = vmatpush1.msra.mxu0 0.0
    %1238 = vmatprep.subr.mxu0 0.0
    %1239 = vmatpush1.msra.mxu0 0.0
    %1240 = vmatprep.subr.mxu0 0.0
    %1241 = vmatpush1.msra.mxu0 0.0
    %1242 = vmatprep.subr.mxu0 0.0
    %1243 = vmatpush1.msra.mxu0 0.0
    %1244 = vmatprep.subr.mxu0 0.0
    %1245 = vmatpush1.msra.mxu0 0.0
    %1246 = vmatprep.subr.mxu0 0.0
    %1247 = vmatpush1.msra.mxu0 0.0
    %1248 = vmatprep.subr.mxu0 0.0
    %1249 = vmatpush1.msra.mxu0 0.0
    %1250 = vmatprep.subr.mxu0 0.0
    %1251 = vmatpush1.msra.mxu0 0.0
    %1252 = vmatprep.subr.mxu0 0.0
    %1253 = vmatpush1.msra.mxu0 0.0
    %1254 = vmatprep.subr.mxu0 0.0
    %1255 = vmatpush1.msra.mxu0 0.0
    %1256 = vmatprep.subr.mxu0 0.0
    %1257 = vmatpush1.msra.mxu0 0.0
    %1258 = vmatprep.subr.mxu0 0.0
    %1259 = vmatpush1.msra.mxu0 0.0
    %1260 = vmatprep.subr.mxu0 0.0
    %1261 = vmatpush1.msra.mxu0 0.0
    %1262 = vmatprep.subr.mxu0 0.0
    %1263 = vmatpush1.msra.mxu0 0.0
    %1264 = vmatprep.subr.mxu0 0.0
    %1265 = vmatpush1.msra.mxu0 0.0
    %1266 = vmatprep.subr.mxu0 0.0
    %1267 = vmatpush1.msra.mxu0 0.0
    %1268 = vmatprep.subr.mxu0 0.0
    %1269 = vmatpush1.msra.mxu0 0.0
    %1270 = vmatprep.subr.mxu0 0.0
    %1271 = vmatpush1.msra.mxu0 0.0
    %1272 = vmatprep.subr.mxu0 0.0
    %1273 = vmatpush1.msra.mxu0 0.0
    %1274 = vmatprep.mubr.f32.mxu0 0.0
    %1275 = vmatmul.mubr.f32.gmra.mrb[0].mxu0 %v1208
    %v1276 = vpop.f32.mrb[0].mxu0
    %v1277 = vadd.f32 0.0, %v1276
    %v1278 = vpop.f32.mrb[0].mxu0
    %1279 = vdwg.mxu0
    %v1281 = vsel %vm403, %v1277, 0
    %1283 = vmatprep.subr.mxu0 0.0
    %1284 = vmatpush1.msra.mxu0 %v109
    %1285 = vmatprep.subr.mxu0 0.0
    %1286 = vmatpush1.msra.mxu0 0.0
    %1287 = vmatprep.subr.mxu0 0.0
    %1288 = vmatpush1.msra.mxu0 0.0
    %1289 = vmatprep.subr.mxu0 0.0
    %1290 = vmatpush1.msra.mxu0 0.0
    %1291 = vmatprep.subr.mxu0 0.0
    %1292 = vmatpush1.msra.mxu0 0.0
    %1293 = vmatprep.subr.mxu0 0.0
    %1294 = vmatpush1.msra.mxu0 0.0
    %1295 = vmatprep.subr.mxu0 0.0
    %1296 = vmatpush1.msra.mxu0 0.0
    %1297 = vmatprep.subr.mxu0 0.0
    %1298 = vmatpush1.msra.mxu0 0.0
    %1299 = vmatprep.subr.mxu0 0.0
    %1300 = vmatpush1.msra.mxu0 0.0
    %1301 = vmatprep.subr.mxu0 0.0
    %1302 = vmatpush1.msra.mxu0 0.0
    %1303 = vmatprep.subr.mxu0 0.0
    %1304 = vmatpush1.msra.mxu0 0.0
    %1305 = vmatprep.subr.mxu0 0.0
    %1306 = vmatpush1.msra.mxu0 0.0
    %1307 = vmatprep.subr.mxu0 0.0
    %1308 = vmatpush1.msra.mxu0 0.0
    %1309 = vmatprep.subr.mxu0 0.0
    %1310 = vmatpush1.msra.mxu0 0.0
    %1311 = vmatprep.subr.mxu0 0.0
    %1312 = vmatpush1.msra.mxu0 0.0
    %1313 = vmatprep.subr.mxu0 0.0
    %1314 = vmatpush1.msra.mxu0 0.0
    %1315 = vmatprep.subr.mxu0 0.0
    %1316 = vmatpush1.msra.mxu0 0.0
    %1317 = vmatprep.subr.mxu0 0.0
    %1318 = vmatpush1.msra.mxu0 0.0
    %1319 = vmatprep.subr.mxu0 0.0
    %1320 = vmatpush1.msra.mxu0 0.0
    %1321 = vmatprep.subr.mxu0 0.0
    %1322 = vmatpush1.msra.mxu0 0.0
    %1323 = vmatprep.subr.mxu0 0.0
    %1324 = vmatpush1.msra.mxu0 0.0
    %1325 = vmatprep.subr.mxu0 0.0
    %1326 = vmatpush1.msra.mxu0 0.0
    %1327 = vmatprep.subr.mxu0 0.0
    %1328 = vmatpush1.msra.mxu0 0.0
    %1329 = vmatprep.subr.mxu0 0.0
    %1330 = vmatpush1.msra.mxu0 0.0
    %1331 = vmatprep.subr.mxu0 0.0
    %1332 = vmatpush1.msra.mxu0 0.0
    %1333 = vmatprep.subr.mxu0 0.0
    %1334 = vmatpush1.msra.mxu0 0.0
    %1335 = vmatprep.subr.mxu0 0.0
    %1336 = vmatpush1.msra.mxu0 0.0
    %1337 = vmatprep.subr.mxu0 0.0
    %1338 = vmatpush1.msra.mxu0 0.0
    %1339 = vmatprep.subr.mxu0 0.0
    %1340 = vmatpush1.msra.mxu0 0.0
    %1341 = vmatprep.subr.mxu0 0.0
    %1342 = vmatpush1.msra.mxu0 0.0
    %1343 = vmatprep.subr.mxu0 0.0
    %1344 = vmatpush1.msra.mxu0 0.0
    %1345 = vmatprep.subr.mxu0 0.0
    %1346 = vmatpush1.msra.mxu0 0.0
    %1347 = vmatprep.mubr.f32.mxu0 0.0
    %1348 = vmatmul.mubr.f32.gmra.mrb[0].mxu0 %v1281
    %v1349 = vpop.f32.mrb[0].mxu0
    %v1350 = vadd.f32 0.0, %v1349
    %v1351 = vpop.f32.mrb[0].mxu0
    %1352 = vdwg.mxu0
    %v1353 = vadd.f32 %v1114, %v1350
    %v1354 = vld [vmem:[#allocation2] sm:$0xff]
    %v1355 = vadd.f32 %v1354, %v1353
    %v1357 = vlaneseq
    %v1358 = vshrl.u32 %v1357, 7
    %v1359 = vsub.s32 0, %v1358
    %v1360 = vrot.slane %v110, %v1359
    %v1362 = vadd.f32 %v1355, %v1360
    %v1363 = vsel %vm125, %v1362, 0.0
    %1364 = vadd.xlane.f32.xlu0 %v1363
    %v1365 = vpop.xlane.xlu0 %1364
    %v1366 = vrcp.pop 32.0
    %v1367 = vmul.f32 %v1365, %v1366
    %v1368 = vsub.f32 %v1362, %v1367
    %v1369 = vmul.f32 %v1368, %v1368
    %v1370 = vsel %vm125, %v1369, 0.0
    %1371 = vadd.xlane.f32.xlu0 %v1370
    %v1372 = vpop.xlane.xlu0 %1371
    %v1373 = vmul.f32 %v1372, %v1366
    %v1374 = vadd.f32 %v1373, 1e-05
    %v1375 = vrsqrt.pop %v1374
    %v1376 = vmul.f32 %v1368, %v1375
    %v1378 = vlaneseq
    %v1379 = vshrl.u32 %v1378, 7
    %v1380 = vsub.s32 0, %v1379
    %v1381 = vrot.slane %v111, %v1380
    %v1383 = vmul.f32 %v1376, %v1381
    %v1385 = vlaneseq
    %v1386 = vshrl.u32 %v1385, 7
    %v1387 = vsub.s32 0, %v1386
    %v1388 = vrot.slane %v112, %v1387
    %v1390 = vadd.f32 %v1383, %v1388
    %1391 = vst.msk [vmem:[#allocation11] sm:$0xff] %vm125, %v1390
    %v1393 = vsel %vm403, %v204, 0
    %v1396 = vsel %vm403, %v304, 0
    %1398 = vmatprep.subr.mxu0 0.0
    %1399 = vmatpush1.xpose.msra.mxu0 %v1396
    %1400 = vmatprep.subr.mxu0 0.0
    %1401 = vmatpush1.xpose.msra.mxu0 0.0
    %1402 = vmatprep.subr.mxu0 0.0
    %1403 = vmatpush1.xpose.msra.mxu0 0.0
    %1404 = vmatprep.subr.mxu0 0.0
    %1405 = vmatpush1.xpose.msra.mxu0 0.0
    %1406 = vmatprep.subr.mxu0 0.0
    %1407 = vmatpush1.xpose.msra.mxu0 0.0
    %1408 = vmatprep.subr.mxu0 0.0
    %1409 = vmatpush1.xpose.msra.mxu0 0.0
    %1410 = vmatprep.subr.mxu0 0.0
    %1411 = vmatpush1.xpose.msra.mxu0 0.0
    %1412 = vmatprep.subr.mxu0 0.0
    %1413 = vmatpush1.xpose.msra.mxu0 0.0
    %1414 = vmatprep.subr.mxu0 0.0
    %1415 = vmatpush1.xpose.msra.mxu0 0.0
    %1416 = vmatprep.subr.mxu0 0.0
    %1417 = vmatpush1.xpose.msra.mxu0 0.0
    %1418 = vmatprep.subr.mxu0 0.0
    %1419 = vmatpush1.xpose.msra.mxu0 0.0
    %1420 = vmatprep.subr.mxu0 0.0
    %1421 = vmatpush1.xpose.msra.mxu0 0.0
    %1422 = vmatprep.subr.mxu0 0.0
    %1423 = vmatpush1.xpose.msra.mxu0 0.0
    %1424 = vmatprep.subr.mxu0 0.0
    %1425 = vmatpush1.xpose.msra.mxu0 0.0
    %1426 = vmatprep.subr.mxu0 0.0
    %1427 = vmatpush1.xpose.msra.mxu0 0.0
    %1428 = vmatprep.subr.mxu0 0.0
    %1429 = vmatpush1.xpose.msra.mxu0 0.0
    %1430 = vmatprep.subr.mxu0 0.0
    %1431 = vmatpush1.xpose.msra.mxu0 0.0
    %1432 = vmatprep.subr.mxu0 0.0
    %1433 = vmatpush1.xpose.msra.mxu0 0.0
    %1434 = vmatprep.subr.mxu0 0.0
    %1435 = vmatpush1.xpose.msra.mxu0 0.0
    %1436 = vmatprep.subr.mxu0 0.0
    %1437 = vmatpush1.xpose.msra.mxu0 0.0
    %1438 = vmatprep.subr.mxu0 0.0
    %1439 = vmatpush1.xpose.msra.mxu0 0.0
    %1440 = vmatprep.subr.mxu0 0.0
    %1441 = vmatpush1.xpose.msra.mxu0 0.0
    %1442 = vmatprep.subr.mxu0 0.0
    %1443 = vmatpush1.xpose.msra.mxu0 0.0
    %1444 = vmatprep.subr.mxu0 0.0
    %1445 = vmatpush1.xpose.msra.mxu0 0.0
    %1446 = vmatprep.subr.mxu0 0.0
    %1447 = vmatpush1.xpose.msra.mxu0 0.0
    %1448 = vmatprep.subr.mxu0 0.0
    %1449 = vmatpush1.xpose.msra.mxu0 0.0
    %1450 = vmatprep.subr.mxu0 0.0
    %1451 = vmatpush1.xpose.msra.mxu0 0.0
    %1452 = vmatprep.subr.mxu0 0.0
    %1453 = vmatpush1.xpose.msra.mxu0 0.0
    %1454 = vmatprep.subr.mxu0 0.0
    %1455 = vmatpush1.xpose.msra.mxu0 0.0
    %1456 = vmatprep.subr.mxu0 0.0
    %1457 = vmatpush1.xpose.msra.mxu0 0.0
    %1458 = vmatprep.subr.mxu0 0.0
    %1459 = vmatpush1.xpose.msra.mxu0 0.0
    %1460 = vmatprep.subr.mxu0 0.0
    %1461 = vmatpush1.xpose.msra.mxu0 0.0
    %1462 = vmatprep.mubr.f32.mxu0 0.0
    %1463 = vmatmul.mubr.f32.gmra.mrb[0].mxu0 %v1393
    %v1464 = vpop.f32.mrb[0].mxu0
    %v1465 = vadd.f32 0.0, %v1464
    %v1466 = vpop.f32.mrb[0].mxu0
    %1467 = vdwg.mxu0
    %v1468 = vsel %vm403, %v1465, -inf
    %1469 = vmax.xlane.f32.xlu0 %v1468
    %v1470 = vpop.xlane.xlu0 %1469
    %v1471 = vsub.f32 %v1465, %v1470
    %v1472 = vmul.f32 %v1471, 1.442695
    %v1473 = vpow.pop %v1472
    %v1474 = vsel %vm403, %v1473, 0.0
    %1475 = vadd.xlane.f32.xlu0 %v1474
    %v1476 = vpop.xlane.xlu0 %1475
    %v1477 = vrcp.pop %v1476
    %v1478 = vmul.f32 %v1473, %v1477
    %v1480 = vsel %vm403, %v1478, 0
    %1482 = vmatprep.subr.mxu0 0.0
    %1483 = vmatpush1.msra.mxu0 %v400
    %1484 = vmatprep.subr.mxu0 0.0
    %1485 = vmatpush1.msra.mxu0 0.0
    %1486 = vmatprep.subr.mxu0 0.0
    %1487 = vmatpush1.msra.mxu0 0.0
    %1488 = vmatprep.subr.mxu0 0.0
    %1489 = vmatpush1.msra.mxu0 0.0
    %1490 = vmatprep.subr.mxu0 0.0
    %1491 = vmatpush1.msra.mxu0 0.0
    %1492 = vmatprep.subr.mxu0 0.0
    %1493 = vmatpush1.msra.mxu0 0.0
    %1494 = vmatprep.subr.mxu0 0.0
    %1495 = vmatpush1.msra.mxu0 0.0
    %1496 = vmatprep.subr.mxu0 0.0
    %1497 = vmatpush1.msra.mxu0 0.0
    %1498 = vmatprep.subr.mxu0 0.0
    %1499 = vmatpush1.msra.mxu0 0.0
    %1500 = vmatprep.subr.mxu0 0.0
    %1501 = vmatpush1.msra.mxu0 0.0
    %1502 = vmatprep.subr.mxu0 0.0
    %1503 = vmatpush1.msra.mxu0 0.0
    %1504 = vmatprep.subr.mxu0 0.0
    %1505 = vmatpush1.msra.mxu0 0.0
    %1506 = vmatprep.subr.mxu0 0.0
    %1507 = vmatpush1.msra.mxu0 0.0
    %1508 = vmatprep.subr.mxu0 0.0
    %1509 = vmatpush1.msra.mxu0 0.0
    %1510 = vmatprep.subr.mxu0 0.0
    %1511 = vmatpush1.msra.mxu0 0.0
    %1512 = vmatprep.subr.mxu0 0.0
    %1513 = vmatpush1.msra.mxu0 0.0
    %1514 = vmatprep.subr.mxu0 0.0
    %1515 = vmatpush1.msra.mxu0 0.0
    %1516 = vmatprep.subr.mxu0 0.0
    %1517 = vmatpush1.msra.mxu0 0.0
    %1518 = vmatprep.subr.mxu0 0.0
    %1519 = vmatpush1.msra.mxu0 0.0
    %1520 = vmatprep.subr.mxu0 0.0
    %1521 = vmatpush1.msra.mxu0 0.0
    %1522 = vmatprep.subr.mxu0 0.0
    %1523 = vmatpush1.msra.mxu0 0.0
    %1524 = vmatprep.subr.mxu0 0.0
    %1525 = vmatpush1.msra.mxu0 0.0
    %1526 = vmatprep.subr.mxu0 0.0
    %1527 = vmatpush1.msra.mxu0 0.0
    %1528 = vmatprep.subr.mxu0 0.0
    %1529 = vmatpush1.msra.mxu0 0.0
    %1530 = vmatprep.subr.mxu0 0.0
    %1531 = vmatpush1.msra.mxu0 0.0
    %1532 = vmatprep.subr.mxu0 0.0
    %1533 = vmatpush1.msra.mxu0 0.0
    %1534 = vmatprep.subr.mxu0 0.0
    %1535 = vmatpush1.msra.mxu0 0.0
    %1536 = vmatprep.subr.mxu0 0.0
    %1537 = vmatpush1.msra.mxu0 0.0
    %1538 = vmatprep.subr.mxu0 0.0
    %1539 = vmatpush1.msra.mxu0 0.0
    %1540 = vmatprep.subr.mxu0 0.0
    %1541 = vmatpush1.msra.mxu0 0.0
    %1542 = vmatprep.subr.mxu0 0.0
    %1543 = vmatpush1.msra.mxu0 0.0
    %1544 = vmatprep.subr.mxu0 0.0
    %1545 = vmatpush1.msra.mxu0 0.0
    %1546 = vmatprep.mubr.f32.mxu0 0.0
    %1547 = vmatmul.mubr.f32.gmra.mrb[0].mxu0 %v1480
    %v1548 = vpop.f32.mrb[0].mxu0
    %v1549 = vadd.f32 0.0, %v1548
    %v1550 = vpop.f32.mrb[0].mxu0
    %1551 = vdwg.mxu0
    %1552 = vrot.lane.b32.xlu0 %v204, 120
    %v1553 = vpop.permute.xlu0 %1552
    %1554 = vrot.lane.b32.xlu0 %v304, 120
    %v1555 = vpop.permute.xlu0 %1554
    %v1556 = vsel %vm403, %v1553, 0
    %v1558 = vsel %vm403, %v1555, 0
    %1560 = vmatprep.subr.mxu0 0.0
    %1561 = vmatpush1.xpose.msra.mxu0 %v1558
    %1562 = vmatprep.subr.mxu0 0.0
    %1563 = vmatpush1.xpose.msra.mxu0 0.0
    %1564 = vmatprep.subr.mxu0 0.0
    %1565 = vmatpush1.xpose.msra.mxu0 0.0
    %1566 = vmatprep.subr.mxu0 0.0
    %1567 = vmatpush1.xpose.msra.mxu0 0.0
    %1568 = vmatprep.subr.mxu0 0.0
    %1569 = vmatpush1.xpose.msra.mxu0 0.0
    %1570 = vmatprep.subr.mxu0 0.0
    %1571 = vmatpush1.xpose.msra.mxu0 0.0
    %1572 = vmatprep.subr.mxu0 0.0
    %1573 = vmatpush1.xpose.msra.mxu0 0.0
    %1574 = vmatprep.subr.mxu0 0.0
    %1575 = vmatpush1.xpose.msra.mxu0 0.0
    %1576 = vmatprep.subr.mxu0 0.0
    %1577 = vmatpush1.xpose.msra.mxu0 0.0
    %1578 = vmatprep.subr.mxu0 0.0
    %1579 = vmatpush1.xpose.msra.mxu0 0.0
    %1580 = vmatprep.subr.mxu0 0.0
    %1581 = vmatpush1.xpose.msra.mxu0 0.0
    %1582 = vmatprep.subr.mxu0 0.0
    %1583 = vmatpush1.xpose.msra.mxu0 0.0
    %1584 = vmatprep.subr.mxu0 0.0
    %1585 = vmatpush1.xpose.msra.mxu0 0.0
    %1586 = vmatprep.subr.mxu0 0.0
    %1587 = vmatpush1.xpose.msra.mxu0 0.0
    %1588 = vmatprep.subr.mxu0 0.0
    %1589 = vmatpush1.xpose.msra.mxu0 0.0
    %1590 = vmatprep.subr.mxu0 0.0
    %1591 = vmatpush1.xpose.msra.mxu0 0.0
    %1592 = vmatprep.subr.mxu0 0.0
    %1593 = vmatpush1.xpose.msra.mxu0 0.0
    %1594 = vmatprep.subr.mxu0 0.0
    %1595 = vmatpush1.xpose.msra.mxu0 0.0
    %1596 = vmatprep.subr.mxu0 0.0
    %1597 = vmatpush1.xpose.msra.mxu0 0.0
    %1598 = vmatprep.subr.mxu0 0.0
    %1599 = vmatpush1.xpose.msra.mxu0 0.0
    %1600 = vmatprep.subr.mxu0 0.0
    %1601 = vmatpush1.xpose.msra.mxu0 0.0
    %1602 = vmatprep.subr.mxu0 0.0
    %1603 = vmatpush1.xpose.msra.mxu0 0.0
    %1604 = vmatprep.subr.mxu0 0.0
    %1605 = vmatpush1.xpose.msra.mxu0 0.0
    %1606 = vmatprep.subr.mxu0 0.0
    %1607 = vmatpush1.xpose.msra.mxu0 0.0
    %1608 = vmatprep.subr.mxu0 0.0
    %1609 = vmatpush1.xpose.msra.mxu0 0.0
    %1610 = vmatprep.subr.mxu0 0.0
    %1611 = vmatpush1.xpose.msra.mxu0 0.0
    %1612 = vmatprep.subr.mxu0 0.0
    %1613 = vmatpush1.xpose.msra.mxu0 0.0
    %1614 = vmatprep.subr.mxu0 0.0
    %1615 = vmatpush1.xpose.msra.mxu0 0.0
    %1616 = vmatprep.subr.mxu0 0.0
    %1617 = vmatpush1.xpose.msra.mxu0 0.0
    %1618 = vmatprep.subr.mxu0 0.0
    %1619 = vmatpush1.xpose.msra.mxu0 0.0
    %1620 = vmatprep.subr.mxu0 0.0
    %1621 = vmatpush1.xpose.msra.mxu0 0.0
    %1622 = vmatprep.subr.mxu0 0.0
    %1623 = vmatpush1.xpose.msra.mxu0 0.0
    %1624 = vmatprep.mubr.f32.mxu0 0.0
    %1625 = vmatmul.mubr.f32.gmra.mrb[0].mxu0 %v1556
    %v1626 = vpop.f32.mrb[0].mxu0
    %v1627 = vadd.f32 0.0, %v1626
    %v1628 = vpop.f32.mrb[0].mxu0
    %1629 = vdwg.mxu0
    %v1630 = vsel %vm403, %v1627, -inf
    %1631 = vmax.xlane.f32.xlu0 %v1630
    %v1632 = vpop.xlane.xlu0 %1631
    %v1633 = vsub.f32 %v1627, %v1632
    %v1634 = vmul.f32 %v1633, 1.442695
    %v1635 = vpow.pop %v1634
    %v1636 = vsel %vm403, %v1635, 0.0
    %1637 = vadd.xlane.f32.xlu0 %v1636
    %v1638 = vpop.xlane.xlu0 %1637
    %v1639 = vrcp.pop %v1638
    %v1640 = vmul.f32 %v1635, %v1639
    %1642 = vrot.lane.b32.xlu0 %v400, 120
    %v1643 = vpop.permute.xlu0 %1642
    %v1646 = vsel %vm403, %v1640, 0
    %1648 = vmatprep.subr.mxu0 0.0
    %1649 = vmatpush1.msra.mxu0 %v1643
    %1650 = vmatprep.subr.mxu0 0.0
    %1651 = vmatpush1.msra.mxu0 0.0
    %1652 = vmatprep.subr.mxu0 0.0
    %1653 = vmatpush1.msra.mxu0 0.0
    %1654 = vmatprep.subr.mxu0 0.0
    %1655 = vmatpush1.msra.mxu0 0.0
    %1656 = vmatprep.subr.mxu0 0.0
    %1657 = vmatpush1.msra.mxu0 0.0
    %1658 = vmatprep.subr.mxu0 0.0
    %1659 = vmatpush1.msra.mxu0 0.0
    %1660 = vmatprep.subr.mxu0 0.0
    %1661 = vmatpush1.msra.mxu0 0.0
    %1662 = vmatprep.subr.mxu0 0.0
    %1663 = vmatpush1.msra.mxu0 0.0
    %1664 = vmatprep.subr.mxu0 0.0
    %1665 = vmatpush1.msra.mxu0 0.0
    %1666 = vmatprep.subr.mxu0 0.0
    %1667 = vmatpush1.msra.mxu0 0.0
    %1668 = vmatprep.subr.mxu0 0.0
    %1669 = vmatpush1.msra.mxu0 0.0
    %1670 = vmatprep.subr.mxu0 0.0
    %1671 = vmatpush1.msra.mxu0 0.0
    %1672 = vmatprep.subr.mxu0 0.0
    %1673 = vmatpush1.msra.mxu0 0.0
    %1674 = vmatprep.subr.mxu0 0.0
    %1675 = vmatpush1.msra.mxu0 0.0
    %1676 = vmatprep.subr.mxu0 0.0
    %1677 = vmatpush1.msra.mxu0 0.0
    %1678 = vmatprep.subr.mxu0 0.0
    %1679 = vmatpush1.msra.mxu0 0.0
    %1680 = vmatprep.subr.mxu0 0.0
    %1681 = vmatpush1.msra.mxu0 0.0
    %1682 = vmatprep.subr.mxu0 0.0
    %1683 = vmatpush1.msra.mxu0 0.0
    %1684 = vmatprep.subr.mxu0 0.0
    %1685 = vmatpush1.msra.mxu0 0.0
    %1686 = vmatprep.subr.mxu0 0.0
    %1687 = vmatpush1.msra.mxu0 0.0
    %1688 = vmatprep.subr.mxu0 0.0
    %1689 = vmatpush1.msra.mxu0 0.0
    %1690 = vmatprep.subr.mxu0 0.0
    %1691 = vmatpush1.msra.mxu0 0.0
    %1692 = vmatprep.subr.mxu0 0.0
    %1693 = vmatpush1.msra.mxu0 0.0
    %1694 = vmatprep.subr.mxu0 0.0
    %1695 = vmatpush1.msra.mxu0 0.0
    %1696 = vmatprep.subr.mxu0 0.0
    %1697 = vmatpush1.msra.mxu0 0.0
    %1698 = vmatprep.subr.mxu0 0.0
    %1699 = vmatpush1.msra.mxu0 0.0
    %1700 = vmatprep.subr.mxu0 0.0
    %1701 = vmatpush1.msra.mxu0 0.0
    %1702 = vmatprep.subr.mxu0 0.0
    %1703 = vmatpush1.msra.mxu0 0.0
    %1704 = vmatprep.subr.mxu0 0.0
    %1705 = vmatpush1.msra.mxu0 0.0
    %1706 = vmatprep.subr.mxu0 0.0
    %1707 = vmatpush1.msra.mxu0 0.0
    %1708 = vmatprep.subr.mxu0 0.0
    %1709 = vmatpush1.msra.mxu0 0.0
    %1710 = vmatprep.subr.mxu0 0.0
    %1711 = vmatpush1.msra.mxu0 0.0
    %1712 = vmatprep.mubr.f32.mxu0 0.0
    %1713 = vmatmul.mubr.f32.gmra.mrb[0].mxu0 %v1646
    %v1714 = vpop.f32.mrb[0].mxu0
    %v1715 = vadd.f32 0.0, %v1714
    %v1716 = vpop.f32.mrb[0].mxu0
    %1717 = vdwg.mxu0
    %v1719 = vsel %vm403, %v1715, 0
    %1721 = vmatprep.subr.mxu0 0.0
    %1722 = vmatpush1.msra.mxu0 %v107
    %1723 = vmatprep.subr.mxu0 0.0
    %1724 = vmatpush1.msra.mxu0 0.0
    %1725 = vmatprep.subr.mxu0 0.0
    %1726 = vmatpush1.msra.mxu0 0.0
    %1727 = vmatprep.subr.mxu0 0.0
    %1728 = vmatpush1.msra.mxu0 0.0
    %1729 = vmatprep.subr.mxu0 0.0
    %1730 = vmatpush1.msra.mxu0 0.0
    %1731 = vmatprep.subr.mxu0 0.0
    %1732 = vmatpush1.msra.mxu0 0.0
    %1733 = vmatprep.subr.mxu0 0.0
    %1734 = vmatpush1.msra.mxu0 0.0
    %1735 = vmatprep.subr.mxu0 0.0
    %1736 = vmatpush1.msra.mxu0 0.0
    %1737 = vmatprep.subr.mxu0 0.0
    %1738 = vmatpush1.msra.mxu0 0.0
    %1739 = vmatprep.subr.mxu0 0.0
    %1740 = vmatpush1.msra.mxu0 0.0
    %1741 = vmatprep.subr.mxu0 0.0
    %1742 = vmatpush1.msra.mxu0 0.0
    %1743 = vmatprep.subr.mxu0 0.0
    %1744 = vmatpush1.msra.mxu0 0.0
    %1745 = vmatprep.subr.mxu0 0.0
    %1746 = vmatpush1.msra.mxu0 0.0
    %1747 = vmatprep.subr.mxu0 0.0
    %1748 = vmatpush1.msra.mxu0 0.0
    %1749 = vmatprep.subr.mxu0 0.0
    %1750 = vmatpush1.msra.mxu0 0.0
    %1751 = vmatprep.subr.mxu0 0.0
    %1752 = vmatpush1.msra.mxu0 0.0
    %1753 = vmatprep.subr.mxu0 0.0
    %1754 = vmatpush1.msra.mxu0 0.0
    %1755 = vmatprep.subr.mxu0 0.0
    %1756 = vmatpush1.msra.mxu0 0.0
    %1757 = vmatprep.subr.mxu0 0.0
    %1758 = vmatpush1.msra.mxu0 0.0
    %1759 = vmatprep.subr.mxu0 0.0
    %1760 = vmatpush1.msra.mxu0 0.0
    %1761 = vmatprep.subr.mxu0 0.0
    %1762 = vmatpush1.msra.mxu0 0.0
    %1763 = vmatprep.subr.mxu0 0.0
    %1764 = vmatpush1.msra.mxu0 0.0
    %1765 = vmatprep.subr.mxu0 0.0
    %1766 = vmatpush1.msra.mxu0 0.0
    %1767 = vmatprep.subr.mxu0 0.0
    %1768 = vmatpush1.msra.mxu0 0.0
    %1769 = vmatprep.subr.mxu0 0.0
    %1770 = vmatpush1.msra.mxu0 0.0
    %1771 = vmatprep.subr.mxu0 0.0
    %1772 = vmatpush1.msra.mxu0 0.0
    %1773 = vmatprep.subr.mxu0 0.0
    %1774 = vmatpush1.msra.mxu0 0.0
    %1775 = vmatprep.subr.mxu0 0.0
    %1776 = vmatpush1.msra.mxu0 0.0
    %1777 = vmatprep.subr.mxu0 0.0
    %1778 = vmatpush1.msra.mxu0 0.0
    %1779 = vmatprep.subr.mxu0 0.0
    %1780 = vmatpush1.msra.mxu0 0.0
    %1781 = vmatprep.subr.mxu0 0.0
    %1782 = vmatpush1.msra.mxu0 0.0
    %1783 = vmatprep.subr.mxu0 0.0
    %1784 = vmatpush1.msra.mxu0 0.0
    %1785 = vmatprep.mubr.f32.mxu0 0.0
    %1786 = vmatmul.mubr.f32.gmra.mrb[0].mxu0 %v1719
    %v1787 = vpop.f32.mrb[0].mxu0
    %v1788 = vadd.f32 0.0, %v1787
    %v1789 = vpop.f32.mrb[0].mxu0
    %1790 = vdwg.mxu0
    %v1792 = vsel %vm403, %v1549, 0
    %1794 = vmatprep.subr.mxu0 0.0
    %1795 = vmatpush1.msra.mxu0 %v106
    %1796 = vmatprep.subr.mxu0 0.0
    %1797 = vmatpush1.msra.mxu0 0.0
    %1798 = vmatprep.subr.mxu0 0.0
    %1799 = vmatpush1.msra.mxu0 0.0
    %1800 = vmatprep.subr.mxu0 0.0
    %1801 = vmatpush1.msra.mxu0 0.0
    %1802 = vmatprep.subr.mxu0 0.0
    %1803 = vmatpush1.msra.mxu0 0.0
    %1804 = vmatprep.subr.mxu0 0.0
    %1805 = vmatpush1.msra.mxu0 0.0
    %1806 = vmatprep.subr.mxu0 0.0
    %1807 = vmatpush1.msra.mxu0 0.0
    %1808 = vmatprep.subr.mxu0 0.0
    %1809 = vmatpush1.msra.mxu0 0.0
    %1810 = vmatprep.subr.mxu0 0.0
    %1811 = vmatpush1.msra.mxu0 0.0
    %1812 = vmatprep.subr.mxu0 0.0
    %1813 = vmatpush1.msra.mxu0 0.0
    %1814 = vmatprep.subr.mxu0 0.0
    %1815 = vmatpush1.msra.mxu0 0.0
    %1816 = vmatprep.subr.mxu0 0.0
    %1817 = vmatpush1.msra.mxu0 0.0
    %1818 = vmatprep.subr.mxu0 0.0
    %1819 = vmatpush1.msra.mxu0 0.0
    %1820 = vmatprep.subr.mxu0 0.0
    %1821 = vmatpush1.msra.mxu0 0.0
    %1822 = vmatprep.subr.mxu0 0.0
    %1823 = vmatpush1.msra.mxu0 0.0
    %1824 = vmatprep.subr.mxu0 0.0
    %1825 = vmatpush1.msra.mxu0 0.0
    %1826 = vmatprep.subr.mxu0 0.0
    %1827 = vmatpush1.msra.mxu0 0.0
    %1828 = vmatprep.subr.mxu0 0.0
    %1829 = vmatpush1.msra.mxu0 0.0
    %1830 = vmatprep.subr.mxu0 0.0
    %1831 = vmatpush1.msra.mxu0 0.0
    %1832 = vmatprep.subr.mxu0 0.0
    %1833 = vmatpush1.msra.mxu0 0.0
    %1834 = vmatprep.subr.mxu0 0.0
    %1835 = vmatpush1.msra.mxu0 0.0
    %1836 = vmatprep.subr.mxu0 0.0
    %1837 = vmatpush1.msra.mxu0 0.0
    %1838 = vmatprep.subr.mxu0 0.0
    %1839 = vmatpush1.msra.mxu0 0.0
    %1840 = vmatprep.subr.mxu0 0.0
    %1841 = vmatpush1.msra.mxu0 0.0
    %1842 = vmatprep.subr.mxu0 0.0
    %1843 = vmatpush1.msra.mxu0 0.0
    %1844 = vmatprep.subr.mxu0 0.0
    %1845 = vmatpush1.msra.mxu0 0.0
    %1846 = vmatprep.subr.mxu0 0.0
    %1847 = vmatpush1.msra.mxu0 0.0
    %1848 = vmatprep.subr.mxu0 0.0
    %1849 = vmatpush1.msra.mxu0 0.0
    %1850 = vmatprep.subr.mxu0 0.0
    %1851 = vmatpush1.msra.mxu0 0.0
    %1852 = vmatprep.subr.mxu0 0.0
    %1853 = vmatpush1.msra.mxu0 0.0
    %1854 = vmatprep.subr.mxu0 0.0
    %1855 = vmatpush1.msra.mxu0 0.0
    %1856 = vmatprep.subr.mxu0 0.0
    %1857 = vmatpush1.msra.mxu0 0.0
    %1858 = vmatprep.mubr.f32.mxu0 0.0
    %1859 = vmatmul.mubr.f32.gmra.mrb[0].mxu0 %v1792
    %v1860 = vpop.f32.mrb[0].mxu0
    %v1861 = vadd.f32 %v1788, %v1860
    %v1862 = vpop.f32.mrb[0].mxu0
    %1863 = vdwg.mxu0
    %1864 = vrot.lane.b32.xlu0 %v204, 112
    %v1865 = vpop.permute.xlu0 %1864
    %1866 = vrot.lane.b32.xlu0 %v304, 112
    %v1867 = vpop.permute.xlu0 %1866
    %v1868 = vsel %vm403, %v1865, 0
    %v1870 = vsel %vm403, %v1867, 0
    %1872 = vmatprep.subr.mxu0 0.0
    %1873 = vmatpush1.xpose.msra.mxu0 %v1870
    %1874 = vmatprep.subr.mxu0 0.0
    %1875 = vmatpush1.xpose.msra.mxu0 0.0
    %1876 = vmatprep.subr.mxu0 0.0
    %1877 = vmatpush1.xpose.msra.mxu0 0.0
    %1878 = vmatprep.subr.mxu0 0.0
    %1879 = vmatpush1.xpose.msra.mxu0 0.0
    %1880 = vmatprep.subr.mxu0 0.0
    %1881 = vmatpush1.xpose.msra.mxu0 0.0
    %1882 = vmatprep.subr.mxu0 0.0
    %1883 = vmatpush1.xpose.msra.mxu0 0.0
    %1884 = vmatprep.subr.mxu0 0.0
    %1885 = vmatpush1.xpose.msra.mxu0 0.0
    %1886 = vmatprep.subr.mxu0 0.0
    %1887 = vmatpush1.xpose.msra.mxu0 0.0
    %1888 = vmatprep.subr.mxu0 0.0
    %1889 = vmatpush1.xpose.msra.mxu0 0.0
    %1890 = vmatprep.subr.mxu0 0.0
    %1891 = vmatpush1.xpose.msra.mxu0 0.0
    %1892 = vmatprep.subr.mxu0 0.0
    %1893 = vmatpush1.xpose.msra.mxu0 0.0
    %1894 = vmatprep.subr.mxu0 0.0
    %1895 = vmatpush1.xpose.msra.mxu0 0.0
    %1896 = vmatprep.subr.mxu0 0.0
    %1897 = vmatpush1.xpose.msra.mxu0 0.0
    %1898 = vmatprep.subr.mxu0 0.0
    %1899 = vmatpush1.xpose.msra.mxu0 0.0
    %1900 = vmatprep.subr.mxu0 0.0
    %1901 = vmatpush1.xpose.msra.mxu0 0.0
    %1902 = vmatprep.subr.mxu0 0.0
    %1903 = vmatpush1.xpose.msra.mxu0 0.0
    %1904 = vmatprep.subr.mxu0 0.0
    %1905 = vmatpush1.xpose.msra.mxu0 0.0
    %1906 = vmatprep.subr.mxu0 0.0
    %1907 = vmatpush1.xpose.msra.mxu0 0.0
    %1908 = vmatprep.subr.mxu0 0.0
    %1909 = vmatpush1.xpose.msra.mxu0 0.0
    %1910 = vmatprep.subr.mxu0 0.0
    %1911 = vmatpush1.xpose.msra.mxu0 0.0
    %1912 = vmatprep.subr.mxu0 0.0
    %1913 = vmatpush1.xpose.msra.mxu0 0.0
    %1914 = vmatprep.subr.mxu0 0.0
    %1915 = vmatpush1.xpose.msra.mxu0 0.0
    %1916 = vmatprep.subr.mxu0 0.0
    %1917 = vmatpush1.xpose.msra.mxu0 0.0
    %1918 = vmatprep.subr.mxu0 0.0
    %1919 = vmatpush1.xpose.msra.mxu0 0.0
    %1920 = vmatprep.subr.mxu0 0.0
    %1921 = vmatpush1.xpose.msra.mxu0 0.0
    %1922 = vmatprep.subr.mxu0 0.0
    %1923 = vmatpush1.xpose.msra.mxu0 0.0
    %1924 = vmatprep.subr.mxu0 0.0
    %1925 = vmatpush1.xpose.msra.mxu0 0.0
    %1926 = vmatprep.subr.mxu0 0.0
    %1927 = vmatpush1.xpose.msra.mxu0 0.0
    %1928 = vmatprep.subr.mxu0 0.0
    %1929 = vmatpush1.xpose.msra.mxu0 0.0
    %1930 = vmatprep.subr.mxu0 0.0
    %1931 = vmatpush1.xpose.msra.mxu0 0.0
    %1932 = vmatprep.subr.mxu0 0.0
    %1933 = vmatpush1.xpose.msra.mxu0 0.0
    %1934 = vmatprep.subr.mxu0 0.0
    %1935 = vmatpush1.xpose.msra.mxu0 0.0
    %1936 = vmatprep.mubr.f32.mxu0 0.0
    %1937 = vmatmul.mubr.f32.gmra.mrb[0].mxu0 %v1868
    %v1938 = vpop.f32.mrb[0].mxu0
    %v1939 = vadd.f32 0.0, %v1938
    %v1940 = vpop.f32.mrb[0].mxu0
    %1941 = vdwg.mxu0
    %v1942 = vsel %vm403, %v1939, -inf
    %1943 = vmax.xlane.f32.xlu0 %v1942
    %v1944 = vpop.xlane.xlu0 %1943
    %v1945 = vsub.f32 %v1939, %v1944
    %v1946 = vmul.f32 %v1945, 1.442695
    %v1947 = vpow.pop %v1946
    %v1948 = vsel %vm403, %v1947, 0.0
    %1949 = vadd.xlane.f32.xlu0 %v1948
    %v1950 = vpop.xlane.xlu0 %1949
    %v1951 = vrcp.pop %v1950
    %v1952 = vmul.f32 %v1947, %v1951
    %1953 = vrot.lane.b32.xlu0 %v400, 112
    %v1954 = vpop.permute.xlu0 %1953
    %v1957 = vsel %vm403, %v1952, 0
    %1959 = vmatprep.subr.mxu0 0.0
    %1960 = vmatpush1.msra.mxu0 %v1954
    %1961 = vmatprep.subr.mxu0 0.0
    %1962 = vmatpush1.msra.mxu0 0.0
    %1963 = vmatprep.subr.mxu0 0.0
    %1964 = vmatpush1.msra.mxu0 0.0
    %1965 = vmatprep.subr.mxu0 0.0
    %1966 = vmatpush1.msra.mxu0 0.0
    %1967 = vmatprep.subr.mxu0 0.0
    %1968 = vmatpush1.msra.mxu0 0.0
    %1969 = vmatprep.subr.mxu0 0.0
    %1970 = vmatpush1.msra.mxu0 0.0
    %1971 = vmatprep.subr.mxu0 0.0
    %1972 = vmatpush1.msra.mxu0 0.0
    %1973 = vmatprep.subr.mxu0 0.0
    %1974 = vmatpush1.msra.mxu0 0.0
    %1975 = vmatprep.subr.mxu0 0.0
    %1976 = vmatpush1.msra.mxu0 0.0
    %1977 = vmatprep.subr.mxu0 0.0
    %1978 = vmatpush1.msra.mxu0 0.0
    %1979 = vmatprep.subr.mxu0 0.0
    %1980 = vmatpush1.msra.mxu0 0.0
    %1981 = vmatprep.subr.mxu0 0.0
    %1982 = vmatpush1.msra.mxu0 0.0
    %1983 = vmatprep.subr.mxu0 0.0
    %1984 = vmatpush1.msra.mxu0 0.0
    %1985 = vmatprep.subr.mxu0 0.0
    %1986 = vmatpush1.msra.mxu0 0.0
    %1987 = vmatprep.subr.mxu0 0.0
    %1988 = vmatpush1.msra.mxu0 0.0
    %1989 = vmatprep.subr.mxu0 0.0
    %1990 = vmatpush1.msra.mxu0 0.0
    %1991 = vmatprep.subr.mxu0 0.0
    %1992 = vmatpush1.msra.mxu0 0.0
    %1993 = vmatprep.subr.mxu0 0.0
    %1994 = vmatpush1.msra.mxu0 0.0
    %1995 = vmatprep.subr.mxu0 0.0
    %1996 = vmatpush1.msra.mxu0 0.0
    %1997 = vmatprep.subr.mxu0 0.0
    %1998 = vmatpush1.msra.mxu0 0.0
    %1999 = vmatprep.subr.mxu0 0.0
    %2000 = vmatpush1.msra.mxu0 0.0
    %2001 = vmatprep.subr.mxu0 0.0
    %2002 = vmatpush1.msra.mxu0 0.0
    %2003 = vmatprep.subr.mxu0 0.0
    %2004 = vmatpush1.msra.mxu0 0.0
    %2005 = vmatprep.subr.mxu0 0.0
    %2006 = vmatpush1.msra.mxu0 0.0
    %2007 = vmatprep.subr.mxu0 0.0
    %2008 = vmatpush1.msra.mxu0 0.0
    %2009 = vmatprep.subr.mxu0 0.0
    %2010 = vmatpush1.msra.mxu0 0.0
    %2011 = vmatprep.subr.mxu0 0.0
    %2012 = vmatpush1.msra.mxu0 0.0
    %2013 = vmatprep.subr.mxu0 0.0
    %2014 = vmatpush1.msra.mxu0 0.0
    %2015 = vmatprep.subr.mxu0 0.0
    %2016 = vmatpush1.msra.mxu0 0.0
    %2017 = vmatprep.subr.mxu0 0.0
    %2018 = vmatpush1.msra.mxu0 0.0
    %2019 = vmatprep.subr.mxu0 0.0
    %2020 = vmatpush1.msra.mxu0 0.0
    %2021 = vmatprep.subr.mxu0 0.0
    %2022 = vmatpush1.msra.mxu0 0.0
    %2023 = vmatprep.mubr.f32.mxu0 0.0
    %2024 = vmatmul.mubr.f32.gmra.mrb[0].mxu0 %v1957
    %v2025 = vpop.f32.mrb[0].mxu0
    %v2026 = vadd.f32 0.0, %v2025
    %v2027 = vpop.f32.mrb[0].mxu0
    %2028 = vdwg.mxu0
    %v2030 = vsel %vm403, %v2026, 0
    %2032 = vmatprep.subr.mxu0 0.0
    %2033 = vmatpush1.msra.mxu0 %v108
    %2034 = vmatprep.subr.mxu0 0.0
    %2035 = vmatpush1.msra.mxu0 0.0
    %2036 = vmatprep.subr.mxu0 0.0
    %2037 = vmatpush1.msra.mxu0 0.0
    %2038 = vmatprep.subr.mxu0 0.0
    %2039 = vmatpush1.msra.mxu0 0.0
    %2040 = vmatprep.subr.mxu0 0.0
    %2041 = vmatpush1.msra.mxu0 0.0
    %2042 = vmatprep.subr.mxu0 0.0
    %2043 = vmatpush1.msra.mxu0 0.0
    %2044 = vmatprep.subr.mxu0 0.0
    %2045 = vmatpush1.msra.mxu0 0.0
    %2046 = vmatprep.subr.mxu0 0.0
    %2047 = vmatpush1.msra.mxu0 0.0
    %2048 = vmatprep.subr.mxu0 0.0
    %2049 = vmatpush1.msra.mxu0 0.0
    %2050 = vmatprep.subr.mxu0 0.0
    %2051 = vmatpush1.msra.mxu0 0.0
    %2052 = vmatprep.subr.mxu0 0.0
    %2053 = vmatpush1.msra.mxu0 0.0
    %2054 = vmatprep.subr.mxu0 0.0
    %2055 = vmatpush1.msra.mxu0 0.0
    %2056 = vmatprep.subr.mxu0 0.0
    %2057 = vmatpush1.msra.mxu0 0.0
    %2058 = vmatprep.subr.mxu0 0.0
    %2059 = vmatpush1.msra.mxu0 0.0
    %2060 = vmatprep.subr.mxu0 0.0
    %2061 = vmatpush1.msra.mxu0 0.0
    %2062 = vmatprep.subr.mxu0 0.0
    %2063 = vmatpush1.msra.mxu0 0.0
    %2064 = vmatprep.subr.mxu0 0.0
    %2065 = vmatpush1.msra.mxu0 0.0
    %2066 = vmatprep.subr.mxu0 0.0
    %2067 = vmatpush1.msra.mxu0 0.0
    %2068 = vmatprep.subr.mxu0 0.0
    %2069 = vmatpush1.msra.mxu0 0.0
    %2070 = vmatprep.subr.mxu0 0.0
    %2071 = vmatpush1.msra.mxu0 0.0
    %2072 = vmatprep.subr.mxu0 0.0
    %2073 = vmatpush1.msra.mxu0 0.0
    %2074 = vmatprep.subr.mxu0 0.0
    %2075 = vmatpush1.msra.mxu0 0.0
    %2076 = vmatprep.subr.mxu0 0.0
    %2077 = vmatpush1.msra.mxu0 0.0
    %2078 = vmatprep.subr.mxu0 0.0
    %2079 = vmatpush1.msra.mxu0 0.0
    %2080 = vmatprep.subr.mxu0 0.0
    %2081 = vmatpush1.msra.mxu0 0.0
    %2082 = vmatprep.subr.mxu0 0.0
    %2083 = vmatpush1.msra.mxu0 0.0
    %2084 = vmatprep.subr.mxu0 0.0
    %2085 = vmatpush1.msra.mxu0 0.0
    %2086 = vmatprep.subr.mxu0 0.0
    %2087 = vmatpush1.msra.mxu0 0.0
    %2088 = vmatprep.subr.mxu0 0.0
    %2089 = vmatpush1.msra.mxu0 0.0
    %2090 = vmatprep.subr.mxu0 0.0
    %2091 = vmatpush1.msra.mxu0 0.0
    %2092 = vmatprep.subr.mxu0 0.0
    %2093 = vmatpush1.msra.mxu0 0.0
    %2094 = vmatprep.subr.mxu0 0.0
    %2095 = vmatpush1.msra.mxu0 0.0
    %2096 = vmatprep.mubr.f32.mxu0 0.0
    %2097 = vmatmul.mubr.f32.gmra.mrb[0].mxu0 %v2030
    %v2098 = vpop.f32.mrb[0].mxu0
    %v2099 = vadd.f32 0.0, %v2098
    %v2100 = vpop.f32.mrb[0].mxu0
    %2101 = vdwg.mxu0
    %v2102 = vadd.f32 %v1861, %v2099
    %2103 = vrot.lane.b32.xlu0 %v204, 104
    %v2104 = vpop.permute.xlu0 %2103
    %2105 = vrot.lane.b32.xlu0 %v304, 104
    %v2106 = vpop.permute.xlu0 %2105
    %v2107 = vsel %vm403, %v2104, 0
    %v2109 = vsel %vm403, %v2106, 0
    %2111 = vmatprep.subr.mxu0 0.0
    %2112 = vmatpush1.xpose.msra.mxu0 %v2109
    %2113 = vmatprep.subr.mxu0 0.0
    %2114 = vmatpush1.xpose.msra.mxu0 0.0
    %2115 = vmatprep.subr.mxu0 0.0
    %2116 = vmatpush1.xpose.msra.mxu0 0.0
    %2117 = vmatprep.subr.mxu0 0.0
    %2118 = vmatpush1.xpose.msra.mxu0 0.0
    %2119 = vmatprep.subr.mxu0 0.0
    %2120 = vmatpush1.xpose.msra.mxu0 0.0
    %2121 = vmatprep.subr.mxu0 0.0
    %2122 = vmatpush1.xpose.msra.mxu0 0.0
    %2123 = vmatprep.subr.mxu0 0.0
    %2124 = vmatpush1.xpose.msra.mxu0 0.0
    %2125 = vmatprep.subr.mxu0 0.0
    %2126 = vmatpush1.xpose.msra.mxu0 0.0
    %2127 = vmatprep.subr.mxu0 0.0
    %2128 = vmatpush1.xpose.msra.mxu0 0.0
    %2129 = vmatprep.subr.mxu0 0.0
    %2130 = vmatpush1.xpose.msra.mxu0 0.0
    %2131 = vmatprep.subr.mxu0 0.0
    %2132 = vmatpush1.xpose.msra.mxu0 0.0
    %2133 = vmatprep.subr.mxu0 0.0
    %2134 = vmatpush1.xpose.msra.mxu0 0.0
    %2135 = vmatprep.subr.mxu0 0.0
    %2136 = vmatpush1.xpose.msra.mxu0 0.0
    %2137 = vmatprep.subr.mxu0 0.0
    %2138 = vmatpush1.xpose.msra.mxu0 0.0
    %2139 = vmatprep.subr.mxu0 0.0
    %2140 = vmatpush1.xpose.msra.mxu0 0.0
    %2141 = vmatprep.subr.mxu0 0.0
    %2142 = vmatpush1.xpose.msra.mxu0 0.0
    %2143 = vmatprep.subr.mxu0 0.0
    %2144 = vmatpush1.xpose.msra.mxu0 0.0
    %2145 = vmatprep.subr.mxu0 0.0
    %2146 = vmatpush1.xpose.msra.mxu0 0.0
    %2147 = vmatprep.subr.mxu0 0.0
    %2148 = vmatpush1.xpose.msra.mxu0 0.0
    %2149 = vmatprep.subr.mxu0 0.0
    %2150 = vmatpush1.xpose.msra.mxu0 0.0
    %2151 = vmatprep.subr.mxu0 0.0
    %2152 = vmatpush1.xpose.msra.mxu0 0.0
    %2153 = vmatprep.subr.mxu0 0.0
    %2154 = vmatpush1.xpose.msra.mxu0 0.0
    %2155 = vmatprep.subr.mxu0 0.0
    %2156 = vmatpush1.xpose.msra.mxu0 0.0
    %2157 = vmatprep.subr.mxu0 0.0
    %2158 = vmatpush1.xpose.msra.mxu0 0.0
    %2159 = vmatprep.subr.mxu0 0.0
    %2160 = vmatpush1.xpose.msra.mxu0 0.0
    %2161 = vmatprep.subr.mxu0 0.0
    %2162 = vmatpush1.xpose.msra.mxu0 0.0
    %2163 = vmatprep.subr.mxu0 0.0
    %2164 = vmatpush1.xpose.msra.mxu0 0.0
    %2165 = vmatprep.subr.mxu0 0.0
    %2166 = vmatpush1.xpose.msra.mxu0 0.0
    %2167 = vmatprep.subr.mxu0 0.0
    %2168 = vmatpush1.xpose.msra.mxu0 0.0
    %2169 = vmatprep.subr.mxu0 0.0
    %2170 = vmatpush1.xpose.msra.mxu0 0.0
    %2171 = vmatprep.subr.mxu0 0.0
    %2172 = vmatpush1.xpose.msra.mxu0 0.0
    %2173 = vmatprep.subr.mxu0 0.0
    %2174 = vmatpush1.xpose.msra.mxu0 0.0
    %2175 = vmatprep.mubr.f32.mxu0 0.0
    %2176 = vmatmul.mubr.f32.gmra.mrb[0].mxu0 %v2107
    %v2177 = vpop.f32.mrb[0].mxu0
    %v2178 = vadd.f32 0.0, %v2177
    %v2179 = vpop.f32.mrb[0].mxu0
    %2180 = vdwg.mxu0
    %v2181 = vsel %vm403, %v2178, -inf
    %2182 = vmax.xlane.f32.xlu0 %v2181
    %v2183 = vpop.xlane.xlu0 %2182
    %v2184 = vsub.f32 %v2178, %v2183
    %v2185 = vmul.f32 %v2184, 1.442695
    %v2186 = vpow.pop %v2185
    %v2187 = vsel %vm403, %v2186, 0.0
    %2188 = vadd.xlane.f32.xlu0 %v2187
    %v2189 = vpop.xlane.xlu0 %2188
    %v2190 = vrcp.pop %v2189
    %v2191 = vmul.f32 %v2186, %v2190
    %2192 = vrot.lane.b32.xlu0 %v400, 104
    %v2193 = vpop.permute.xlu0 %2192
    %v2196 = vsel %vm403, %v2191, 0
    %2198 = vmatprep.subr.mxu0 0.0
    %2199 = vmatpush1.msra.mxu0 %v2193
    %2200 = vmatprep.subr.mxu0 0.0
    %2201 = vmatpush1.msra.mxu0 0.0
    %2202 = vmatprep.subr.mxu0 0.0
    %2203 = vmatpush1.msra.mxu0 0.0
    %2204 = vmatprep.subr.mxu0 0.0
    %2205 = vmatpush1.msra.mxu0 0.0
    %2206 = vmatprep.subr.mxu0 0.0
    %2207 = vmatpush1.msra.mxu0 0.0
    %2208 = vmatprep.subr.mxu0 0.0
    %2209 = vmatpush1.msra.mxu0 0.0
    %2210 = vmatprep.subr.mxu0 0.0
    %2211 = vmatpush1.msra.mxu0 0.0
    %2212 = vmatprep.subr.mxu0 0.0
    %2213 = vmatpush1.msra.mxu0 0.0
    %2214 = vmatprep.subr.mxu0 0.0
    %2215 = vmatpush1.msra.mxu0 0.0
    %2216 = vmatprep.subr.mxu0 0.0
    %2217 = vmatpush1.msra.mxu0 0.0
    %2218 = vmatprep.subr.mxu0 0.0
    %2219 = vmatpush1.msra.mxu0 0.0
    %2220 = vmatprep.subr.mxu0 0.0
    %2221 = vmatpush1.msra.mxu0 0.0
    %2222 = vmatprep.subr.mxu0 0.0
    %2223 = vmatpush1.msra.mxu0 0.0
    %2224 = vmatprep.subr.mxu0 0.0
    %2225 = vmatpush1.msra.mxu0 0.0
    %2226 = vmatprep.subr.mxu0 0.0
    %2227 = vmatpush1.msra.mxu0 0.0
    %2228 = vmatprep.subr.mxu0 0.0
    %2229 = vmatpush1.msra.mxu0 0.0
    %2230 = vmatprep.subr.mxu0 0.0
    %2231 = vmatpush1.msra.mxu0 0.0
    %2232 = vmatprep.subr.mxu0 0.0
    %2233 = vmatpush1.msra.mxu0 0.0
    %2234 = vmatprep.subr.mxu0 0.0
    %2235 = vmatpush1.msra.mxu0 0.0
    %2236 = vmatprep.subr.mxu0 0.0
    %2237 = vmatpush1.msra.mxu0 0.0
    %2238 = vmatprep.subr.mxu0 0.0
    %2239 = vmatpush1.msra.mxu0 0.0
    %2240 = vmatprep.subr.mxu0 0.0
    %2241 = vmatpush1.msra.mxu0 0.0
    %2242 = vmatprep.subr.mxu0 0.0
    %2243 = vmatpush1.msra.mxu0 0.0
    %2244 = vmatprep.subr.mxu0 0.0
    %2245 = vmatpush1.msra.mxu0 0.0
    %2246 = vmatprep.subr.mxu0 0.0
    %2247 = vmatpush1.msra.mxu0 0.0
    %2248 = vmatprep.subr.mxu0 0.0
    %2249 = vmatpush1.msra.mxu0 0.0
    %2250 = vmatprep.subr.mxu0 0.0
    %2251 = vmatpush1.msra.mxu0 0.0
    %2252 = vmatprep.subr.mxu0 0.0
    %2253 = vmatpush1.msra.mxu0 0.0
    %2254 = vmatprep.subr.mxu0 0.0
    %2255 = vmatpush1.msra.mxu0 0.0
    %2256 = vmatprep.subr.mxu0 0.0
    %2257 = vmatpush1.msra.mxu0 0.0
    %2258 = vmatprep.subr.mxu0 0.0
    %2259 = vmatpush1.msra.mxu0 0.0
    %2260 = vmatprep.subr.mxu0 0.0
    %2261 = vmatpush1.msra.mxu0 0.0
    %2262 = vmatprep.mubr.f32.mxu0 0.0
    %2263 = vmatmul.mubr.f32.gmra.mrb[0].mxu0 %v2196
    %v2264 = vpop.f32.mrb[0].mxu0
    %v2265 = vadd.f32 0.0, %v2264
    %v2266 = vpop.f32.mrb[0].mxu0
    %2267 = vdwg.mxu0
    %v2269 = vsel %vm403, %v2265, 0
    %2271 = vmatprep.subr.mxu0 0.0
    %2272 = vmatpush1.msra.mxu0 %v109
    %2273 = vmatprep.subr.mxu0 0.0
    %2274 = vmatpush1.msra.mxu0 0.0
    %2275 = vmatprep.subr.mxu0 0.0
    %2276 = vmatpush1.msra.mxu0 0.0
    %2277 = vmatprep.subr.mxu0 0.0
    %2278 = vmatpush1.msra.mxu0 0.0
    %2279 = vmatprep.subr.mxu0 0.0
    %2280 = vmatpush1.msra.mxu0 0.0
    %2281 = vmatprep.subr.mxu0 0.0
    %2282 = vmatpush1.msra.mxu0 0.0
    %2283 = vmatprep.subr.mxu0 0.0
    %2284 = vmatpush1.msra.mxu0 0.0
    %2285 = vmatprep.subr.mxu0 0.0
    %2286 = vmatpush1.msra.mxu0 0.0
    %2287 = vmatprep.subr.mxu0 0.0
    %2288 = vmatpush1.msra.mxu0 0.0
    %2289 = vmatprep.subr.mxu0 0.0
    %2290 = vmatpush1.msra.mxu0 0.0
    %2291 = vmatprep.subr.mxu0 0.0
    %2292 = vmatpush1.msra.mxu0 0.0
    %2293 = vmatprep.subr.mxu0 0.0
    %2294 = vmatpush1.msra.mxu0 0.0
    %2295 = vmatprep.subr.mxu0 0.0
    %2296 = vmatpush1.msra.mxu0 0.0
    %2297 = vmatprep.subr.mxu0 0.0
    %2298 = vmatpush1.msra.mxu0 0.0
    %2299 = vmatprep.subr.mxu0 0.0
    %2300 = vmatpush1.msra.mxu0 0.0
    %2301 = vmatprep.subr.mxu0 0.0
    %2302 = vmatpush1.msra.mxu0 0.0
    %2303 = vmatprep.subr.mxu0 0.0
    %2304 = vmatpush1.msra.mxu0 0.0
    %2305 = vmatprep.subr.mxu0 0.0
    %2306 = vmatpush1.msra.mxu0 0.0
    %2307 = vmatprep.subr.mxu0 0.0
    %2308 = vmatpush1.msra.mxu0 0.0
    %2309 = vmatprep.subr.mxu0 0.0
    %2310 = vmatpush1.msra.mxu0 0.0
    %2311 = vmatprep.subr.mxu0 0.0
    %2312 = vmatpush1.msra.mxu0 0.0
    %2313 = vmatprep.subr.mxu0 0.0
    %2314 = vmatpush1.msra.mxu0 0.0
    %2315 = vmatprep.subr.mxu0 0.0
    %2316 = vmatpush1.msra.mxu0 0.0
    %2317 = vmatprep.subr.mxu0 0.0
    %2318 = vmatpush1.msra.mxu0 0.0
    %2319 = vmatprep.subr.mxu0 0.0
    %2320 = vmatpush1.msra.mxu0 0.0
    %2321 = vmatprep.subr.mxu0 0.0
    %2322 = vmatpush1.msra.mxu0 0.0
    %2323 = vmatprep.subr.mxu0 0.0
    %2324 = vmatpush1.msra.mxu0 0.0
    %2325 = vmatprep.subr.mxu0 0.0
    %2326 = vmatpush1.msra.mxu0 0.0
    %2327 = vmatprep.subr.mxu0 0.0
    %2328 = vmatpush1.msra.mxu0 0.0
    %2329 = vmatprep.subr.mxu0 0.0
    %2330 = vmatpush1.msra.mxu0 0.0
    %2331 = vmatprep.subr.mxu0 0.0
    %2332 = vmatpush1.msra.mxu0 0.0
    %2333 = vmatprep.subr.mxu0 0.0
    %2334 = vmatpush1.msra.mxu0 0.0
    %2335 = vmatprep.mubr.f32.mxu0 0.0
    %2336 = vmatmul.mubr.f32.gmra.mrb[0].mxu0 %v2269
    %v2337 = vpop.f32.mrb[0].mxu0
    %v2338 = vadd.f32 0.0, %v2337
    %v2339 = vpop.f32.mrb[0].mxu0
    %2340 = vdwg.mxu0
    %v2341 = vadd.f32 %v2102, %v2338
    %s2342 = scalar_lea.vmem [#allocation2], 8
    %v2343 = vld [vmem:[%s2342] sm:$0xff]
    %v2344 = vadd.f32 %v2343, %v2341
    %v2345 = vadd.f32 %v2344, %v1360
    %v2346 = vsel %vm125, %v2345, 0.0
    %2347 = vadd.xlane.f32.xlu0 %v2346
    %v2348 = vpop.xlane.xlu0 %2347
    %v2349 = vmul.f32 %v2348, %v1366
    %v2350 = vsub.f32 %v2345, %v2349
    %v2351 = vmul.f32 %v2350, %v2350
    %v2352 = vsel %vm125, %v2351, 0.0
    %2353 = vadd.xlane.f32.xlu0 %v2352
    %v2354 = vpop.xlane.xlu0 %2353
    %v2355 = vmul.f32 %v2354, %v1366
    %v2356 = vadd.f32 %v2355, 1e-05
    %v2357 = vrsqrt.pop %v2356
    %v2358 = vmul.f32 %v2350, %v2357
    %v2359 = vmul.f32 %v2358, %v1381
    %v2360 = vadd.f32 %v2359, %v1388
    %s2361 = scalar_lea.vmem [#allocation11], 8
    %2362 = vst.msk [vmem:[%s2361] sm:$0xff] %vm125, %v2360
    // Predicated region
    $region58: #{tpu_custom_call.1} parent=1 // pred_check
      _
    $region59: #{tpu_custom_call.1} parent=1 // pred_check_branch
      %2364 = sbr.rel (0) target = $region61
    $region60: #{tpu_custom_call.1} parent=1 // pred_region
      %s2366 = ssub.s32 256, 256
      %2367 = vsyncadd [#allocation4], %s2366
      %s2368 = sshll.u32 [#allocation11], 4
      %s2369 = int_to_ptr.vmem [resolvable:$true] %s2368
      %2374 = dma.vmem_to_hbm [thread:$0]  %s2369, 256, %s9, [#allocation4], 128, 128, 8
    $region61: #{tpu_custom_call.1} parent=1 // pred_fallthru
      _
    // Predicated region
    $region62: #{tpu_custom_call.1} parent=1 // pred_check
      _
    $region63: #{tpu_custom_call.1} parent=1 // pred_check_branch
      %2376 = sbr.rel (0) target = $region65
    $region64: #{tpu_custom_call.1} parent=1 // pred_region
      %2377 = dma.done [#allocation4], 256
    $region65: #{tpu_custom_call.1} parent=1 // pred_fallthru
      _
    %2378 = vsyncpa [#allocation3], 1
    %2379 = vsyncpa [#allocation6], 1
    %2380 = vsyncpa [#allocation9], 1
    %2381 = vsyncpa [#allocation4], 1

</llo_original>
